<compile_context>
chip_gen: v6e
topology: v6e:2x2x1
jax: 0.10.0
libtpu: 0.0.40
codegen_flags: <defaults>
</compile_context>

<pallas_src>
import functools

import jax
import jax.numpy as jnp
from jax import lax
from jax.experimental import pallas as pl
from jax.experimental.pallas import tpu as pltpu


# ----------------------------------------------------------------------------
# In-kernel helpers (pure values: everything stays in vregs/VMEM).
# ----------------------------------------------------------------------------
def _convt_bn_relu(x, w, gamma, beta, cout, kk):
    """Non-overlapping ConvTranspose (as matmul) -> batch-stat BN -> ReLU.

    x     : (M, Cin) f32
    w     : (Cin, kk*cout) f32, columns ordered (patch position p, channel c)
    gamma : (1, cout) f32,  beta : (1, cout) f32

    Returns the NEXT layer's input directly:
      kk == 1 -> (M, cout)
      kk  > 1 -> (M*kk, cout), rows stacked per patch position (order (p, row)).
    Row order is irrelevant for downstream matmul + batch-stat BN; the final
    spatial permutation is resolved once on the tiny kernel output.
    """
    y = jnp.dot(x, w, preferred_element_type=jnp.float32)        # (M, kk*cout)
    n = jnp.float32(y.shape[0] * kk)
    s1 = jnp.sum(y, axis=0, keepdims=True)                       # column sums
    s2 = jnp.sum(y * y, axis=0, keepdims=True)
    if kk > 1:
        # Fold the kk patch positions into per-channel sums (static lane slices).
        s1 = sum(s1[:, p * cout:(p + 1) * cout] for p in range(kk))
        s2 = sum(s2[:, p * cout:(p + 1) * cout] for p in range(kk))
    mean = s1 / n
    var = jnp.maximum(s2 / n - mean * mean, jnp.float32(0.0))    # clamp >= 0
    a = gamma * lax.rsqrt(var + jnp.float32(1e-5))               # (1, cout)
    c = beta - mean * a
    if kk == 1:
        return jnp.maximum(y * a + c, jnp.float32(0.0))
    pieces = [jnp.maximum(y[:, p * cout:(p + 1) * cout] * a + c, jnp.float32(0.0))
              for p in range(kk)]
    return jnp.concatenate(pieces, axis=0)                       # (M*kk, cout)


# ----------------------------------------------------------------------------
# Single fused kernel: d1 -> d2 -> d3 -> d4 (grid=(1,), full-array blocks).
# ----------------------------------------------------------------------------
def _decoder_kernel(x_ref, w1_ref, w2_ref, w3_ref, w4_ref, gb_ref, gb4_ref,
                    o_ref, *, c1, c2, c3, kk2, kk3):
    o1, o2, o3 = 0, c1, c1 + c2

    # d1 (k=1) -> d2 -> d3, all intermediates VMEM-resident.
    a1 = _convt_bn_relu(x_ref[...], w1_ref[...],
                        gb_ref[0:1, o1:o1 + c1], gb_ref[1:2, o1:o1 + c1], c1, 1)
    x3 = _convt_bn_relu(a1, w2_ref[...],
                        gb_ref[0:1, o2:o2 + c2], gb_ref[1:2, o2:o2 + c2], c2, kk2)
    x4 = _convt_bn_relu(x3, w3_ref[...],
                        gb_ref[0:1, o3:o3 + c3], gb_ref[1:2, o3:o3 + c3], c3, kk3)

    # d4 (k=1): contract the channel axis of x4 in place -> lane-dense (c4, M4).
    y4 = lax.dot_general(w4_ref[...], x4,
                         dimension_numbers=(((1,), (1,)), ((), ())),
                         preferred_element_type=jnp.float32)     # (c4, M4)
    n = jnp.float32(y4.shape[1])
    mean = jnp.sum(y4, axis=1, keepdims=True) / n
    var = jnp.maximum(jnp.sum(y4 * y4, axis=1, keepdims=True) / n - mean * mean,
                      jnp.float32(0.0))
    a = gb4_ref[:, 0:1] * lax.rsqrt(var + jnp.float32(1e-5))     # (c4, 1)
    c = gb4_ref[:, 1:2] - mean * a
    o_ref[...] = jax.nn.sigmoid(y4 * a + c)


# ----------------------------------------------------------------------------
# Host-side wrapper.
# ----------------------------------------------------------------------------
def _full_spec(shape):
    """BlockSpec covering the whole array (grid=(1,))."""
    return pl.BlockSpec(shape, lambda i: tuple(0 for _ in shape))


def _wmat(w):
    """(Cin, Cout, k, k) -> (Cin, k*k*Cout), columns ordered (ky, kx, cout)."""
    cin, cout, k, _ = w.shape
    return jnp.transpose(w, (0, 2, 3, 1)).reshape(cin, k * k * cout).astype(jnp.float32)


def decoder_forward(x, params, pooling_kernel, decoder_in_size):
    s = decoder_in_size
    k2 = pooling_kernel[1]          # d2 stride/kernel
    k3 = pooling_kernel[0]          # d3 stride/kernel
    kk2, kk3 = k2 * k2, k3 * k3

    w1, _, g1, be1 = params["d1"]   # conv bias is dead under batch-stat BN
    w2, _, g2, be2 = params["d2"]
    w3, _, g3, be3 = params["d3"]
    w4, _, g4, be4 = params["d4"]

    cin1 = w1.shape[0]
    c1, c2, c3, c4 = w1.shape[1], w2.shape[1], w3.shape[1], w4.shape[1]

    x = x.reshape(-1, cin1, s, s)                 # x.view(-1, 256, s, s)
    B = x.shape[0]
    M1 = B * s * s
    M4 = M1 * kk2 * kk3
    H4 = s * k2 * k3

    # Channels-last flattened input (the only pre-kernel layout op, ~32 KiB).
    x1 = jnp.transpose(x, (0, 2, 3, 1)).reshape(M1, cin1).astype(jnp.float32)

    w1m, w2m, w3m = _wmat(w1), _wmat(w2), _wmat(w3)
    w4m = w4.reshape(w4.shape[0], c4).T.astype(jnp.float32)      # (c4, Cin)

    # Pack d1..d3 gamma/beta into one (2, P) operand, d4 into a (c4, 2) operand.
    P = max(128, ((c1 + c2 + c3 + 127) // 128) * 128)
    pad = jnp.zeros((P - (c1 + c2 + c3),), jnp.float32)
    gb123 = jnp.stack([
        jnp.concatenate([g1.astype(jnp.float32), g2.astype(jnp.float32),
                         g3.astype(jnp.float32), pad]),
        jnp.concatenate([be1.astype(jnp.float32), be2.astype(jnp.float32),
                         be3.astype(jnp.float32), pad]),
    ])                                                            # (2, P)
    gb4 = jnp.stack([g4.astype(jnp.float32), be4.astype(jnp.float32)], axis=1)

    out_t = pl.pallas_call(
        functools.partial(_decoder_kernel, c1=c1, c2=c2, c3=c3, kk2=kk2, kk3=kk3),
        out_shape=jax.ShapeDtypeStruct((c4, M4), jnp.float32),
        grid_spec=pltpu.PrefetchScalarGridSpec(
            num_scalar_prefetch=0,
            grid=(1,),
            in_specs=[
                _full_spec((M1, cin1)),
                _full_spec((cin1, c1)),
                _full_spec((c1, kk2 * c2)),
                _full_spec((c2, kk3 * c3)),
                _full_spec((c4, c3)),
                _full_spec((2, P)),
                _full_spec((c4, 2)),
            ],
            out_specs=_full_spec((c4, M4)),
        ),
        compiler_params=pltpu.CompilerParams(dimension_semantics=("arbitrary",)),
    )(x1, w1m, w2m, w3m, w4m, gb123, gb4)

    # Kernel output columns are ordered (ky3, kx3, ky2, kx2, b, y1, x1); apply
    # the single leftover permutation to this tiny (c4, M4) array only.
    out = (out_t.reshape(c4, k3, k3, k2, k2, B, s, s)
                 .transpose(5, 0, 6, 3, 1, 7, 4, 2)
                 .reshape(B, c4, H4, H4))
    return out


# ----------------------------------------------------------------------------
# Parameters (same shapes as the PyTorch module) and an f32 reference.
# ----------------------------------------------------------------------------
def init_decoder_params(key, color_dim, pooling_kernel):
    cfg = [
        ("d1", 256, 128, 1),
        ("d2", 128, 64, pooling_kernel[1]),
        ("d3", 64, 32, pooling_kernel[0]),
        ("d4", 32, color_dim, 1),
    ]
    params = {}
    for name, cin, cout, k in cfg:
        key, kw, kb, kg, kbe = jax.random.split(key, 5)
        bound = 1.0 / jnp.sqrt(jnp.float32(cin * k * k))
        w = jax.random.uniform(kw, (cin, cout, k, k), jnp.float32, -bound, bound)
        b = jax.random.uniform(kb, (cout,), jnp.float32, -bound, bound)
        gamma = jax.random.uniform(kg, (cout,), jnp.float32, 0.5, 1.5)
        beta = 0.1 * jax.random.normal(kbe, (cout,), jnp.float32)
        params[name] = (w, b, gamma, beta)
    return params


def _reference_decoder(x, params, pooling_kernel, decoder_in_size):
    """Pure-JAX f32 reference (ConvTranspose + batch-stat BN + act), NCHW."""
    def block(x, p, k, act):
        w, b, gamma, beta = p
        B, Cin, H, W = x.shape
        Cout = w.shape[1]
        y = jnp.einsum("bchw,cdij->bdhiwj", x, w,
                       precision=lax.Precision.HIGHEST).reshape(B, Cout, H * k, W * k)
        y = y + b.reshape(1, Cout, 1, 1)
        mean = jnp.mean(y, axis=(0, 2, 3), keepdims=True)
        var = jnp.mean((y - mean) ** 2, axis=(0, 2, 3), keepdims=True)
        z = (y - mean) * lax.rsqrt(var + jnp.float32(1e-5))
        z = z * gamma.reshape(1, Cout, 1, 1) + beta.reshape(1, Cout, 1, 1)
        return jax.nn.sigmoid(z) if act == "sigmoid" else jnp.maximum(z, 0.0)

    s = decoder_in_size
    x = x.reshape(-1, 256, s, s)
    x = block(x, params["d1"], 1, "relu")
    x = block(x, params["d2"], pooling_kernel[1], "relu")
    x = block(x, params["d3"], pooling_kernel[0], "relu")
    return block(x, params["d4"], 1, "sigmoid")


if __name__ == "__main__":
    B = 2
    color_dim = 3
    pooling_kernel = (2, 2)
    decoder_in_size = 4

    key = jax.random.PRNGKey(0)
    key, kx = jax.random.split(key)
    x = jax.random.normal(kx, (B, 256 * decoder_in_size * decoder_in_size), jnp.float32)
    params = init_decoder_params(key, color_dim, pooling_kernel)

    fwd = jax.jit(functools.partial(
        decoder_forward, pooling_kernel=pooling_kernel,
        decoder_in_size=decoder_in_size))
    out = jax.block_until_ready(fwd(x, params))

    expected = (B, color_dim,
                decoder_in_size * pooling_kernel[0] * pooling_kernel[1],
                decoder_in_size * pooling_kernel[0] * pooling_kernel[1])
    assert out.shape == expected, (out.shape, expected)
    assert bool(jnp.all(jnp.isfinite(out)))
    assert bool(jnp.all((out >= 0.0) & (out <= 1.0)))   # sigmoid output range

    # Compare against an f32 reference (all-f32 kernel, so tolerance is tight).
    ref = _reference_decoder(x, params, pooling_kernel, decoder_in_size)
    max_err = float(jnp.max(jnp.abs(out - ref)))
    assert max_err < 2e-2, f"max abs error vs reference: {max_err}"

    print("KERNEL_OK")
</pallas_src>

<mosaic_0001>
module attributes {stable_mosaic.version = 11 : i64} {
  func.func @_decoder_kernel(%arg0: i32, %arg1: memref<32x256xf32, #tpu.memory_space<vmem>>, %arg2: memref<256x128xf32, #tpu.memory_space<vmem>>, %arg3: memref<128x256xf32, #tpu.memory_space<vmem>>, %arg4: memref<64x128xf32, #tpu.memory_space<vmem>>, %arg5: memref<3x32xf32, #tpu.memory_space<vmem>>, %arg6: memref<2x256xf32, #tpu.memory_space<vmem>>, %arg7: memref<3x2xf32, #tpu.memory_space<vmem>>, %arg8: memref<3x512xf32, #tpu.memory_space<vmem>>) attributes {dimension_semantics = [#tpu.dimension_semantics<arbitrary>], iteration_bounds = array<i64: 1>, scalar_prefetch = 0 : i64, scratch_operands = 0 : i64, tpu.core_type = #tpu.core_type<tc>, window_params = [{pipeline_mode = #tpu.pipeline_mode<synchronous>, transform_indices = @transform_0, window_bounds = array<i64: 32, 256>}, {pipeline_mode = #tpu.pipeline_mode<synchronous>, transform_indices = @transform_1, window_bounds = array<i64: 256, 128>}, {pipeline_mode = #tpu.pipeline_mode<synchronous>, transform_indices = @transform_2, window_bounds = array<i64: 128, 256>}, {pipeline_mode = #tpu.pipeline_mode<synchronous>, transform_indices = @transform_3, window_bounds = array<i64: 64, 128>}, {pipeline_mode = #tpu.pipeline_mode<synchronous>, transform_indices = @transform_4, window_bounds = array<i64: 3, 32>}, {pipeline_mode = #tpu.pipeline_mode<synchronous>, transform_indices = @transform_5, window_bounds = array<i64: 2, 256>}, {pipeline_mode = #tpu.pipeline_mode<synchronous>, transform_indices = @transform_6, window_bounds = array<i64: 3, 2>}, {pipeline_mode = #tpu.pipeline_mode<synchronous>, transform_indices = @transform_7, window_bounds = array<i64: 3, 512>}]} {
    %c0 = arith.constant 0 : index
    %c0_0 = arith.constant 0 : index
    %0 = vector.load %arg1[%c0, %c0_0] : memref<32x256xf32, #tpu.memory_space<vmem>>, vector<32x256xf32>
    %c0_1 = arith.constant 0 : index
    %c0_2 = arith.constant 0 : index
    %1 = vector.load %arg2[%c0_1, %c0_2] : memref<256x128xf32, #tpu.memory_space<vmem>>, vector<256x128xf32>
    %c0_3 = arith.constant 0 : index
    %c0_4 = arith.constant 0 : index
    %2 = vector.load %arg6[%c0_3, %c0_4] : memref<2x256xf32, #tpu.memory_space<vmem>>, vector<1x128xf32>
    %c1 = arith.constant 1 : index
    %c0_5 = arith.constant 0 : index
    %3 = vector.load %arg6[%c1, %c0_5] : memref<2x256xf32, #tpu.memory_space<vmem>>, vector<1x128xf32>
    %cst = arith.constant dense<0.000000e+00> : vector<32x128xf32>
    %4 = tpu.matmul %0, %1, %cst {dimension_numbers = #tpu.dot_dimension_numbers<[1], [0], [0], [1], [0, 0, 1, 1], [], []>} : vector<32x256xf32>, vector<256x128xf32>, vector<32x128xf32> -> vector<32x128xf32>
    %cst_6 = arith.constant dense<0.000000e+00> : vector<128xf32>
    %5 = vector.multi_reduction <add>, %4, %cst_6 [0] : vector<32x128xf32> to vector<128xf32>
    %6 = vector.shape_cast %5 : vector<128xf32> to vector<1x128xf32>
    %7 = arith.mulf %4, %4 : vector<32x128xf32>
    %cst_7 = arith.constant dense<0.000000e+00> : vector<128xf32>
    %8 = vector.multi_reduction <add>, %7, %cst_7 [0] : vector<32x128xf32> to vector<128xf32>
    %9 = vector.shape_cast %8 : vector<128xf32> to vector<1x128xf32>
    %cst_8 = arith.constant 3.200000e+01 : f32
    %10 = vector.broadcast %cst_8 : f32 to vector<1x128xf32>
    %11 = arith.divf %6, %10 : vector<1x128xf32>
    %cst_9 = arith.constant 3.200000e+01 : f32
    %12 = vector.broadcast %cst_9 : f32 to vector<1x128xf32>
    %13 = arith.divf %9, %12 : vector<1x128xf32>
    %14 = arith.mulf %11, %11 : vector<1x128xf32>
    %15 = arith.subf %13, %14 : vector<1x128xf32>
    %cst_10 = arith.constant 0.000000e+00 : f32
    %16 = vector.broadcast %cst_10 : f32 to vector<1x128xf32>
    %17 = arith.maximumf %15, %16 : vector<1x128xf32>
    %cst_11 = arith.constant 9.99999974E-6 : f32
    %18 = vector.broadcast %cst_11 : f32 to vector<1x128xf32>
    %19 = arith.addf %17, %18 : vector<1x128xf32>
    %20 = math.rsqrt %19 : vector<1x128xf32>
    %21 = arith.mulf %2, %20 : vector<1x128xf32>
    %22 = arith.mulf %11, %21 : vector<1x128xf32>
    %23 = arith.subf %3, %22 : vector<1x128xf32>
    %24 = vector.broadcast %21 : vector<1x128xf32> to vector<32x128xf32>
    %25 = arith.mulf %4, %24 : vector<32x128xf32>
    %26 = vector.broadcast %23 : vector<1x128xf32> to vector<32x128xf32>
    %27 = arith.addf %25, %26 : vector<32x128xf32>
    %cst_12 = arith.constant 0.000000e+00 : f32
    %28 = vector.broadcast %cst_12 : f32 to vector<32x128xf32>
    %29 = arith.maximumf %27, %28 : vector<32x128xf32>
    %c0_13 = arith.constant 0 : index
    %c0_14 = arith.constant 0 : index
    %30 = vector.load %arg3[%c0_13, %c0_14] : memref<128x256xf32, #tpu.memory_space<vmem>>, vector<128x256xf32>
    %c0_15 = arith.constant 0 : index
    %c128 = arith.constant 128 : index
    %31 = vector.load %arg6[%c0_15, %c128] : memref<2x256xf32, #tpu.memory_space<vmem>>, vector<1x64xf32>
    %c1_16 = arith.constant 1 : index
    %c128_17 = arith.constant 128 : index
    %32 = vector.load %arg6[%c1_16, %c128_17] : memref<2x256xf32, #tpu.memory_space<vmem>>, vector<1x64xf32>
    %cst_18 = arith.constant dense<0.000000e+00> : vector<32x256xf32>
    %33 = tpu.matmul %29, %30, %cst_18 {dimension_numbers = #tpu.dot_dimension_numbers<[1], [0], [0], [1], [0, 0, 1, 1], [], []>} : vector<32x128xf32>, vector<128x256xf32>, vector<32x256xf32> -> vector<32x256xf32>
    %cst_19 = arith.constant dense<0.000000e+00> : vector<256xf32>
    %34 = vector.multi_reduction <add>, %33, %cst_19 [0] : vector<32x256xf32> to vector<256xf32>
    %35 = vector.shape_cast %34 : vector<256xf32> to vector<1x256xf32>
    %36 = arith.mulf %33, %33 : vector<32x256xf32>
    %cst_20 = arith.constant dense<0.000000e+00> : vector<256xf32>
    %37 = vector.multi_reduction <add>, %36, %cst_20 [0] : vector<32x256xf32> to vector<256xf32>
    %38 = vector.shape_cast %37 : vector<256xf32> to vector<1x256xf32>
    %39 = vector.extract_strided_slice %35 {offsets = [0, 0], sizes = [1, 64], strides = [1, 1]} : vector<1x256xf32> to vector<1x64xf32>
    %cst_21 = arith.constant 0.000000e+00 : f32
    %40 = vector.broadcast %cst_21 : f32 to vector<1x64xf32>
    %41 = arith.addf %40, %39 : vector<1x64xf32>
    %42 = vector.extract_strided_slice %35 {offsets = [0, 64], sizes = [1, 64], strides = [1, 1]} : vector<1x256xf32> to vector<1x64xf32>
    %43 = arith.addf %41, %42 : vector<1x64xf32>
    %44 = vector.extract_strided_slice %35 {offsets = [0, 128], sizes = [1, 64], strides = [1, 1]} : vector<1x256xf32> to vector<1x64xf32>
    %45 = arith.addf %43, %44 : vector<1x64xf32>
    %46 = vector.extract_strided_slice %35 {offsets = [0, 192], sizes = [1, 64], strides = [1, 1]} : vector<1x256xf32> to vector<1x64xf32>
    %47 = arith.addf %45, %46 : vector<1x64xf32>
    %48 = vector.extract_strided_slice %38 {offsets = [0, 0], sizes = [1, 64], strides = [1, 1]} : vector<1x256xf32> to vector<1x64xf32>
    %cst_22 = arith.constant 0.000000e+00 : f32
    %49 = vector.broadcast %cst_22 : f32 to vector<1x64xf32>
    %50 = arith.addf %49, %48 : vector<1x64xf32>
    %51 = vector.extract_strided_slice %38 {offsets = [0, 64], sizes = [1, 64], strides = [1, 1]} : vector<1x256xf32> to vector<1x64xf32>
    %52 = arith.addf %50, %51 : vector<1x64xf32>
    %53 = vector.extract_strided_slice %38 {offsets = [0, 128], sizes = [1, 64], strides = [1, 1]} : vector<1x256xf32> to vector<1x64xf32>
    %54 = arith.addf %52, %53 : vector<1x64xf32>
    %55 = vector.extract_strided_slice %38 {offsets = [0, 192], sizes = [1, 64], strides = [1, 1]} : vector<1x256xf32> to vector<1x64xf32>
    %56 = arith.addf %54, %55 : vector<1x64xf32>
    %cst_23 = arith.constant 1.280000e+02 : f32
    %57 = vector.broadcast %cst_23 : f32 to vector<1x64xf32>
    %58 = arith.divf %47, %57 : vector<1x64xf32>
    %cst_24 = arith.constant 1.280000e+02 : f32
    %59 = vector.broadcast %cst_24 : f32 to vector<1x64xf32>
    %60 = arith.divf %56, %59 : vector<1x64xf32>
    %61 = arith.mulf %58, %58 : vector<1x64xf32>
    %62 = arith.subf %60, %61 : vector<1x64xf32>
    %cst_25 = arith.constant 0.000000e+00 : f32
    %63 = vector.broadcast %cst_25 : f32 to vector<1x64xf32>
    %64 = arith.maximumf %62, %63 : vector<1x64xf32>
    %cst_26 = arith.constant 9.99999974E-6 : f32
    %65 = vector.broadcast %cst_26 : f32 to vector<1x64xf32>
    %66 = arith.addf %64, %65 : vector<1x64xf32>
    %67 = math.rsqrt %66 : vector<1x64xf32>
    %68 = arith.mulf %31, %67 : vector<1x64xf32>
    %69 = arith.mulf %58, %68 : vector<1x64xf32>
    %70 = arith.subf %32, %69 : vector<1x64xf32>
    %71 = vector.extract_strided_slice %33 {offsets = [0, 0], sizes = [32, 64], strides = [1, 1]} : vector<32x256xf32> to vector<32x64xf32>
    %72 = vector.broadcast %68 : vector<1x64xf32> to vector<32x64xf32>
    %73 = arith.mulf %71, %72 : vector<32x64xf32>
    %74 = vector.broadcast %70 : vector<1x64xf32> to vector<32x64xf32>
    %75 = arith.addf %73, %74 : vector<32x64xf32>
    %cst_27 = arith.constant 0.000000e+00 : f32
    %76 = vector.broadcast %cst_27 : f32 to vector<32x64xf32>
    %77 = arith.maximumf %75, %76 : vector<32x64xf32>
    %78 = vector.extract_strided_slice %33 {offsets = [0, 64], sizes = [32, 64], strides = [1, 1]} : vector<32x256xf32> to vector<32x64xf32>
    %79 = vector.broadcast %68 : vector<1x64xf32> to vector<32x64xf32>
    %80 = arith.mulf %78, %79 : vector<32x64xf32>
    %81 = vector.broadcast %70 : vector<1x64xf32> to vector<32x64xf32>
    %82 = arith.addf %80, %81 : vector<32x64xf32>
    %cst_28 = arith.constant 0.000000e+00 : f32
    %83 = vector.broadcast %cst_28 : f32 to vector<32x64xf32>
    %84 = arith.maximumf %82, %83 : vector<32x64xf32>
    %85 = vector.extract_strided_slice %33 {offsets = [0, 128], sizes = [32, 64], strides = [1, 1]} : vector<32x256xf32> to vector<32x64xf32>
    %86 = vector.broadcast %68 : vector<1x64xf32> to vector<32x64xf32>
    %87 = arith.mulf %85, %86 : vector<32x64xf32>
    %88 = vector.broadcast %70 : vector<1x64xf32> to vector<32x64xf32>
    %89 = arith.addf %87, %88 : vector<32x64xf32>
    %cst_29 = arith.constant 0.000000e+00 : f32
    %90 = vector.broadcast %cst_29 : f32 to vector<32x64xf32>
    %91 = arith.maximumf %89, %90 : vector<32x64xf32>
    %92 = vector.extract_strided_slice %33 {offsets = [0, 192], sizes = [32, 64], strides = [1, 1]} : vector<32x256xf32> to vector<32x64xf32>
    %93 = vector.broadcast %68 : vector<1x64xf32> to vector<32x64xf32>
    %94 = arith.mulf %92, %93 : vector<32x64xf32>
    %95 = vector.broadcast %70 : vector<1x64xf32> to vector<32x64xf32>
    %96 = arith.addf %94, %95 : vector<32x64xf32>
    %cst_30 = arith.constant 0.000000e+00 : f32
    %97 = vector.broadcast %cst_30 : f32 to vector<32x64xf32>
    %98 = arith.maximumf %96, %97 : vector<32x64xf32>
    %99 = tpu.concatenate %77, %84, %91, %98 in 0 : vector<32x64xf32>, vector<32x64xf32>, vector<32x64xf32>, vector<32x64xf32> -> vector<128x64xf32>
    %c0_31 = arith.constant 0 : index
    %c0_32 = arith.constant 0 : index
    %100 = vector.load %arg4[%c0_31, %c0_32] : memref<64x128xf32, #tpu.memory_space<vmem>>, vector<64x128xf32>
    %c0_33 = arith.constant 0 : index
    %c192 = arith.constant 192 : index
    %101 = vector.load %arg6[%c0_33, %c192] : memref<2x256xf32, #tpu.memory_space<vmem>>, vector<1x32xf32>
    %c1_34 = arith.constant 1 : index
    %c192_35 = arith.constant 192 : index
    %102 = vector.load %arg6[%c1_34, %c192_35] : memref<2x256xf32, #tpu.memory_space<vmem>>, vector<1x32xf32>
    %cst_36 = arith.constant dense<0.000000e+00> : vector<128x128xf32>
    %103 = tpu.matmul %99, %100, %cst_36 {dimension_numbers = #tpu.dot_dimension_numbers<[1], [0], [0], [1], [0, 0, 1, 1], [], []>} : vector<128x64xf32>, vector<64x128xf32>, vector<128x128xf32> -> vector<128x128xf32>
    %cst_37 = arith.constant dense<0.000000e+00> : vector<128xf32>
    %104 = vector.multi_reduction <add>, %103, %cst_37 [0] : vector<128x128xf32> to vector<128xf32>
    %105 = vector.shape_cast %104 : vector<128xf32> to vector<1x128xf32>
    %106 = arith.mulf %103, %103 : vector<128x128xf32>
    %cst_38 = arith.constant dense<0.000000e+00> : vector<128xf32>
    %107 = vector.multi_reduction <add>, %106, %cst_38 [0] : vector<128x128xf32> to vector<128xf32>
    %108 = vector.shape_cast %107 : vector<128xf32> to vector<1x128xf32>
    %109 = vector.extract_strided_slice %105 {offsets = [0, 0], sizes = [1, 32], strides = [1, 1]} : vector<1x128xf32> to vector<1x32xf32>
    %cst_39 = arith.constant 0.000000e+00 : f32
    %110 = vector.broadcast %cst_39 : f32 to vector<1x32xf32>
    %111 = arith.addf %110, %109 : vector<1x32xf32>
    %112 = vector.extract_strided_slice %105 {offsets = [0, 32], sizes = [1, 32], strides = [1, 1]} : vector<1x128xf32> to vector<1x32xf32>
    %113 = arith.addf %111, %112 : vector<1x32xf32>
    %114 = vector.extract_strided_slice %105 {offsets = [0, 64], sizes = [1, 32], strides = [1, 1]} : vector<1x128xf32> to vector<1x32xf32>
    %115 = arith.addf %113, %114 : vector<1x32xf32>
    %116 = vector.extract_strided_slice %105 {offsets = [0, 96], sizes = [1, 32], strides = [1, 1]} : vector<1x128xf32> to vector<1x32xf32>
    %117 = arith.addf %115, %116 : vector<1x32xf32>
    %118 = vector.extract_strided_slice %108 {offsets = [0, 0], sizes = [1, 32], strides = [1, 1]} : vector<1x128xf32> to vector<1x32xf32>
    %cst_40 = arith.constant 0.000000e+00 : f32
    %119 = vector.broadcast %cst_40 : f32 to vector<1x32xf32>
    %120 = arith.addf %119, %118 : vector<1x32xf32>
    %121 = vector.extract_strided_slice %108 {offsets = [0, 32], sizes = [1, 32], strides = [1, 1]} : vector<1x128xf32> to vector<1x32xf32>
    %122 = arith.addf %120, %121 : vector<1x32xf32>
    %123 = vector.extract_strided_slice %108 {offsets = [0, 64], sizes = [1, 32], strides = [1, 1]} : vector<1x128xf32> to vector<1x32xf32>
    %124 = arith.addf %122, %123 : vector<1x32xf32>
    %125 = vector.extract_strided_slice %108 {offsets = [0, 96], sizes = [1, 32], strides = [1, 1]} : vector<1x128xf32> to vector<1x32xf32>
    %126 = arith.addf %124, %125 : vector<1x32xf32>
    %cst_41 = arith.constant 5.120000e+02 : f32
    %127 = vector.broadcast %cst_41 : f32 to vector<1x32xf32>
    %128 = arith.divf %117, %127 : vector<1x32xf32>
    %cst_42 = arith.constant 5.120000e+02 : f32
    %129 = vector.broadcast %cst_42 : f32 to vector<1x32xf32>
    %130 = arith.divf %126, %129 : vector<1x32xf32>
    %131 = arith.mulf %128, %128 : vector<1x32xf32>
    %132 = arith.subf %130, %131 : vector<1x32xf32>
    %cst_43 = arith.constant 0.000000e+00 : f32
    %133 = vector.broadcast %cst_43 : f32 to vector<1x32xf32>
    %134 = arith.maximumf %132, %133 : vector<1x32xf32>
    %cst_44 = arith.constant 9.99999974E-6 : f32
    %135 = vector.broadcast %cst_44 : f32 to vector<1x32xf32>
    %136 = arith.addf %134, %135 : vector<1x32xf32>
    %137 = math.rsqrt %136 : vector<1x32xf32>
    %138 = arith.mulf %101, %137 : vector<1x32xf32>
    %139 = arith.mulf %128, %138 : vector<1x32xf32>
    %140 = arith.subf %102, %139 : vector<1x32xf32>
    %141 = vector.extract_strided_slice %103 {offsets = [0, 0], sizes = [128, 32], strides = [1, 1]} : vector<128x128xf32> to vector<128x32xf32>
    %142 = vector.broadcast %138 : vector<1x32xf32> to vector<128x32xf32>
    %143 = arith.mulf %141, %142 : vector<128x32xf32>
    %144 = vector.broadcast %140 : vector<1x32xf32> to vector<128x32xf32>
    %145 = arith.addf %143, %144 : vector<128x32xf32>
    %cst_45 = arith.constant 0.000000e+00 : f32
    %146 = vector.broadcast %cst_45 : f32 to vector<128x32xf32>
    %147 = arith.maximumf %145, %146 : vector<128x32xf32>
    %148 = vector.extract_strided_slice %103 {offsets = [0, 32], sizes = [128, 32], strides = [1, 1]} : vector<128x128xf32> to vector<128x32xf32>
    %149 = vector.broadcast %138 : vector<1x32xf32> to vector<128x32xf32>
    %150 = arith.mulf %148, %149 : vector<128x32xf32>
    %151 = vector.broadcast %140 : vector<1x32xf32> to vector<128x32xf32>
    %152 = arith.addf %150, %151 : vector<128x32xf32>
    %cst_46 = arith.constant 0.000000e+00 : f32
    %153 = vector.broadcast %cst_46 : f32 to vector<128x32xf32>
    %154 = arith.maximumf %152, %153 : vector<128x32xf32>
    %155 = vector.extract_strided_slice %103 {offsets = [0, 64], sizes = [128, 32], strides = [1, 1]} : vector<128x128xf32> to vector<128x32xf32>
    %156 = vector.broadcast %138 : vector<1x32xf32> to vector<128x32xf32>
    %157 = arith.mulf %155, %156 : vector<128x32xf32>
    %158 = vector.broadcast %140 : vector<1x32xf32> to vector<128x32xf32>
    %159 = arith.addf %157, %158 : vector<128x32xf32>
    %cst_47 = arith.constant 0.000000e+00 : f32
    %160 = vector.broadcast %cst_47 : f32 to vector<128x32xf32>
    %161 = arith.maximumf %159, %160 : vector<128x32xf32>
    %162 = vector.extract_strided_slice %103 {offsets = [0, 96], sizes = [128, 32], strides = [1, 1]} : vector<128x128xf32> to vector<128x32xf32>
    %163 = vector.broadcast %138 : vector<1x32xf32> to vector<128x32xf32>
    %164 = arith.mulf %162, %163 : vector<128x32xf32>
    %165 = vector.broadcast %140 : vector<1x32xf32> to vector<128x32xf32>
    %166 = arith.addf %164, %165 : vector<128x32xf32>
    %cst_48 = arith.constant 0.000000e+00 : f32
    %167 = vector.broadcast %cst_48 : f32 to vector<128x32xf32>
    %168 = arith.maximumf %166, %167 : vector<128x32xf32>
    %169 = tpu.concatenate %147, %154, %161, %168 in 0 : vector<128x32xf32>, vector<128x32xf32>, vector<128x32xf32>, vector<128x32xf32> -> vector<512x32xf32>
    %c0_49 = arith.constant 0 : index
    %c0_50 = arith.constant 0 : index
    %170 = vector.load %arg5[%c0_49, %c0_50] : memref<3x32xf32, #tpu.memory_space<vmem>>, vector<3x32xf32>
    %cst_51 = arith.constant dense<0.000000e+00> : vector<3x512xf32>
    %171 = tpu.matmul %170, %169, %cst_51 {dimension_numbers = #tpu.dot_dimension_numbers<[1], [1], [0], [0], [0, 0, 1, 0], [], []>} : vector<3x32xf32>, vector<512x32xf32>, vector<3x512xf32> -> vector<3x512xf32>
    %cst_52 = arith.constant dense<0.000000e+00> : vector<3xf32>
    %172 = vector.multi_reduction <add>, %171, %cst_52 [1] : vector<3x512xf32> to vector<3xf32>
    %173 = vector.shape_cast %172 : vector<3xf32> to vector<3x1xf32>
    %cst_53 = arith.constant 5.120000e+02 : f32
    %174 = vector.broadcast %cst_53 : f32 to vector<3x1xf32>
    %175 = arith.divf %173, %174 : vector<3x1xf32>
    %176 = arith.mulf %171, %171 : vector<3x512xf32>
    %cst_54 = arith.constant dense<0.000000e+00> : vector<3xf32>
    %177 = vector.multi_reduction <add>, %176, %cst_54 [1] : vector<3x512xf32> to vector<3xf32>
    %178 = vector.shape_cast %177 : vector<3xf32> to vector<3x1xf32>
    %cst_55 = arith.constant 5.120000e+02 : f32
    %179 = vector.broadcast %cst_55 : f32 to vector<3x1xf32>
    %180 = arith.divf %178, %179 : vector<3x1xf32>
    %181 = arith.mulf %175, %175 : vector<3x1xf32>
    %182 = arith.subf %180, %181 : vector<3x1xf32>
    %cst_56 = arith.constant 0.000000e+00 : f32
    %183 = vector.broadcast %cst_56 : f32 to vector<3x1xf32>
    %184 = arith.maximumf %182, %183 : vector<3x1xf32>
    %c0_57 = arith.constant 0 : index
    %c0_58 = arith.constant 0 : index
    %185 = vector.load %arg7[%c0_57, %c0_58] : memref<3x2xf32, #tpu.memory_space<vmem>>, vector<3x1xf32>
    %cst_59 = arith.constant 9.99999974E-6 : f32
    %186 = vector.broadcast %cst_59 : f32 to vector<3x1xf32>
    %187 = arith.addf %184, %186 : vector<3x1xf32>
    %188 = math.rsqrt %187 : vector<3x1xf32>
    %189 = arith.mulf %185, %188 : vector<3x1xf32>
    %c0_60 = arith.constant 0 : index
    %c1_61 = arith.constant 1 : index
    %190 = vector.load %arg7[%c0_60, %c1_61] : memref<3x2xf32, #tpu.memory_space<vmem>>, vector<3x1xf32>
    %191 = arith.mulf %175, %189 : vector<3x1xf32>
    %192 = arith.subf %190, %191 : vector<3x1xf32>
    %193 = vector.broadcast %189 : vector<3x1xf32> to vector<3x512xf32>
    %194 = arith.mulf %171, %193 : vector<3x512xf32>
    %195 = vector.broadcast %192 : vector<3x1xf32> to vector<3x512xf32>
    %196 = arith.addf %194, %195 : vector<3x512xf32>
    %197 = arith.negf %196 : vector<3x512xf32>
    %198 = math.exp %197 : vector<3x512xf32>
    %cst_62 = arith.constant 1.000000e+00 : f32
    %199 = vector.broadcast %cst_62 : f32 to vector<3x512xf32>
    %200 = arith.addf %199, %198 : vector<3x512xf32>
    %201 = arith.divf %199, %200 : vector<3x512xf32>
    %c0_63 = arith.constant 0 : index
    %c0_64 = arith.constant 0 : index
    %202 = vector.load %arg8[%c0_63, %c0_64] : memref<3x512xf32, #tpu.memory_space<vmem>>, vector<3x512xf32>
    tpu.vector_store %arg8[%c0_63, %c0_64], %201 {strides = array<i32>} : memref<3x512xf32, #tpu.memory_space<vmem>>, vector<3x512xf32>,
    return
  }
  func.func @transform_0(%arg0: i32) -> (i32, i32) {
    %c0_i32 = arith.constant 0 : i32
    %c0_i32_0 = arith.constant 0 : i32
    %c0_i32_1 = arith.constant 0 : i32
    return %c0_i32, %c0_i32_0 : i32, i32
  }
  func.func @transform_1(%arg0: i32) -> (i32, i32) {
    %c0_i32 = arith.constant 0 : i32
    %c0_i32_0 = arith.constant 0 : i32
    %c0_i32_1 = arith.constant 0 : i32
    return %c0_i32, %c0_i32_0 : i32, i32
  }
  func.func @transform_2(%arg0: i32) -> (i32, i32) {
    %c0_i32 = arith.constant 0 : i32
    %c0_i32_0 = arith.constant 0 : i32
    %c0_i32_1 = arith.constant 0 : i32
    return %c0_i32, %c0_i32_0 : i32, i32
  }
  func.func @transform_3(%arg0: i32) -> (i32, i32) {
    %c0_i32 = arith.constant 0 : i32
    %c0_i32_0 = arith.constant 0 : i32
    %c0_i32_1 = arith.constant 0 : i32
    return %c0_i32, %c0_i32_0 : i32, i32
  }
  func.func @transform_4(%arg0: i32) -> (i32, i32) {
    %c0_i32 = arith.constant 0 : i32
    %c0_i32_0 = arith.constant 0 : i32
    %c0_i32_1 = arith.constant 0 : i32
    return %c0_i32, %c0_i32_0 : i32, i32
  }
  func.func @transform_5(%arg0: i32) -> (i32, i32) {
    %c0_i32 = arith.constant 0 : i32
    %c0_i32_0 = arith.constant 0 : i32
    %c0_i32_1 = arith.constant 0 : i32
    return %c0_i32, %c0_i32_0 : i32, i32
  }
  func.func @transform_6(%arg0: i32) -> (i32, i32) {
    %c0_i32 = arith.constant 0 : i32
    %c0_i32_0 = arith.constant 0 : i32
    %c0_i32_1 = arith.constant 0 : i32
    return %c0_i32, %c0_i32_0 : i32, i32
  }
  func.func @transform_7(%arg0: i32) -> (i32, i32) {
    %c0_i32 = arith.constant 0 : i32
    %c0_i32_0 = arith.constant 0 : i32
    %c0_i32_1 = arith.constant 0 : i32
    return %c0_i32, %c0_i32_0 : i32, i32
  }
}

</mosaic_0001>

<llo_original>
// kernel: decoder_forward.1
$region0: #{decoder_forward.1}
  #allocation0 [shape = 'u32[]', space=smem, size = 0x4, offset = 0x4, fixed_abs, tag = 'smem constant byte address 0x4 - core index']
  #allocation1 [shape = 'u32[144,128]{1,0:T(1,128)}', space=vmem, size = 0x12000, scoped, tag = 'internal scratch']
  %s0 = inlined_call_operand.vmem [shape: f32[32,256], index: 0, kind: input, shape index: {}]
  %s1 = inlined_call_operand.vmem [shape: f32[256,128], index: 1, kind: input, shape index: {}]
  %s2 = inlined_call_operand.vmem [shape: f32[128,256], index: 2, kind: input, shape index: {}]
  %s3 = inlined_call_operand.vmem [shape: f32[64,128], index: 3, kind: input, shape index: {}]
  %s4 = inlined_call_operand.vmem [shape: f32[3,32], index: 4, kind: input, shape index: {}]
  %s5 = inlined_call_operand.vmem [shape: f32[2,256], index: 5, kind: input, shape index: {}]
  %s6 = inlined_call_operand.vmem [shape: f32[3,2], index: 6, kind: input, shape index: {}]
  %s7 = inlined_call_operand.vmem [shape: f32[3,512], index: 7, kind: output, shape index: {}]
  %s8 = sld [smem:[#allocation0]]
  $region38: #{decoder_forward.1} parent=0
    _
  %s10 = ssub.s32 1, %s8
  %s11 = scalar_select 0, %s10, %s8
  // Predicated region
  $region2: #{decoder_forward.1} parent=0 // pred_check
    _
  $region3: #{decoder_forward.1} parent=0 // pred_check_branch
    %13 = sbr.rel (0) target = $region5
  $region4: #{decoder_forward.1} parent=0 // pred_region
    _
  $region5: #{decoder_forward.1} parent=0 // pred_fallthru
    _
  // Predicated region
  $region6: #{decoder_forward.1} parent=0 // pred_check
    _
  $region7: #{decoder_forward.1} parent=0 // pred_check_branch
    %15 = sbr.rel (0) target = $region9
  $region8: #{decoder_forward.1} parent=0 // pred_region
    _
  $region9: #{decoder_forward.1} parent=0 // pred_fallthru
    _
  // Predicated region
  $region10: #{decoder_forward.1} parent=0 // pred_check
    _
  $region11: #{decoder_forward.1} parent=0 // pred_check_branch
    %17 = sbr.rel (0) target = $region13
  $region12: #{decoder_forward.1} parent=0 // pred_region
    _
  $region13: #{decoder_forward.1} parent=0 // pred_fallthru
    _
  // Predicated region
  $region14: #{decoder_forward.1} parent=0 // pred_check
    _
  $region15: #{decoder_forward.1} parent=0 // pred_check_branch
    %19 = sbr.rel (0) target = $region17
  $region16: #{decoder_forward.1} parent=0 // pred_region
    _
  $region17: #{decoder_forward.1} parent=0 // pred_fallthru
    _
  // Predicated region
  $region18: #{decoder_forward.1} parent=0 // pred_check
    _
  $region19: #{decoder_forward.1} parent=0 // pred_check_branch
    %21 = sbr.rel (0) target = $region21
  $region20: #{decoder_forward.1} parent=0 // pred_region
    _
  $region21: #{decoder_forward.1} parent=0 // pred_fallthru
    _
  // Predicated region
  $region22: #{decoder_forward.1} parent=0 // pred_check
    _
  $region23: #{decoder_forward.1} parent=0 // pred_check_branch
    %23 = sbr.rel (0) target = $region25
  $region24: #{decoder_forward.1} parent=0 // pred_region
    _
  $region25: #{decoder_forward.1} parent=0 // pred_fallthru
    _
  // Predicated region
  $region26: #{decoder_forward.1} parent=0 // pred_check
    _
  $region27: #{decoder_forward.1} parent=0 // pred_check_branch
    %25 = sbr.rel (0) target = $region29
  $region28: #{decoder_forward.1} parent=0 // pred_region
    _
  $region29: #{decoder_forward.1} parent=0 // pred_fallthru
    _
  %v26 = vld [vmem:[%s0] sm:$0xff]
  %v27 = vld [vmem:[%s0 + $0x8] sm:$0xff]
  %v28 = vld [vmem:[%s0 + $0x10] sm:$0xff]
  %v29 = vld [vmem:[%s0 + $0x18] sm:$0xff]
  %v30 = vld [vmem:[%s0 + $0x20] sm:$0xff]
  %v31 = vld [vmem:[%s0 + $0x28] sm:$0xff]
  %v32 = vld [vmem:[%s0 + $0x30] sm:$0xff]
  %v33 = vld [vmem:[%s0 + $0x38] sm:$0xff]
  %v34 = vld [vmem:[%s1] sm:$0xff]
  %v35 = vld [vmem:[%s1 + $0x8] sm:$0xff]
  %v36 = vld [vmem:[%s1 + $0x10] sm:$0xff]
  %v37 = vld [vmem:[%s1 + $0x18] sm:$0xff]
  %v38 = vld [vmem:[%s1 + $0x20] sm:$0xff]
  %v39 = vld [vmem:[%s1 + $0x28] sm:$0xff]
  %v40 = vld [vmem:[%s1 + $0x30] sm:$0xff]
  %v41 = vld [vmem:[%s1 + $0x38] sm:$0xff]
  %v42 = vld [vmem:[%s1 + $0x40] sm:$0xff]
  %v43 = vld [vmem:[%s1 + $0x48] sm:$0xff]
  %v44 = vld [vmem:[%s1 + $0x50] sm:$0xff]
  %v45 = vld [vmem:[%s1 + $0x58] sm:$0xff]
  %v46 = vld [vmem:[%s1 + $0x60] sm:$0xff]
  %v47 = vld [vmem:[%s1 + $0x68] sm:$0xff]
  %v48 = vld [vmem:[%s1 + $0x70] sm:$0xff]
  %v49 = vld [vmem:[%s1 + $0x78] sm:$0xff]
  %v50 = vld [vmem:[%s1 + $0x80] sm:$0xff]
  %v51 = vld [vmem:[%s1 + $0x88] sm:$0xff]
  %v52 = vld [vmem:[%s1 + $0x90] sm:$0xff]
  %v53 = vld [vmem:[%s1 + $0x98] sm:$0xff]
  %v54 = vld [vmem:[%s1 + $0xa0] sm:$0xff]
  %v55 = vld [vmem:[%s1 + $0xa8] sm:$0xff]
  %v56 = vld [vmem:[%s1 + $0xb0] sm:$0xff]
  %v57 = vld [vmem:[%s1 + $0xb8] sm:$0xff]
  %v58 = vld [vmem:[%s1 + $0xc0] sm:$0xff]
  %v59 = vld [vmem:[%s1 + $0xc8] sm:$0xff]
  %v60 = vld [vmem:[%s1 + $0xd0] sm:$0xff]
  %v61 = vld [vmem:[%s1 + $0xd8] sm:$0xff]
  %v62 = vld [vmem:[%s1 + $0xe0] sm:$0xff]
  %v63 = vld [vmem:[%s1 + $0xe8] sm:$0xff]
  %v64 = vld [vmem:[%s1 + $0xf0] sm:$0xff]
  %v65 = vld [vmem:[%s1 + $0xf8] sm:$0xff]
  %v66 = vld [vmem:[%s5] sm:$0x1]
  %v67 = vld [vmem:[%s5 + $0x1] sm:$0x1]
  %68 = vmatprep.subr.mxu0 0.0
  %69 = vmatpush1.msra.mxu0 %v49
  %70 = vmatprep.subr.mxu0 0.0
  %71 = vmatpush1.msra.mxu0 %v48
  %72 = vmatprep.subr.mxu0 0.0
  %73 = vmatpush1.msra.mxu0 %v47
  %74 = vmatprep.subr.mxu0 0.0
  %75 = vmatpush1.msra.mxu0 %v46
  %76 = vmatprep.subr.mxu0 0.0
  %77 = vmatpush1.msra.mxu0 %v45
  %78 = vmatprep.subr.mxu0 0.0
  %79 = vmatpush1.msra.mxu0 %v44
  %80 = vmatprep.subr.mxu0 0.0
  %81 = vmatpush1.msra.mxu0 %v43
  %82 = vmatprep.subr.mxu0 0.0
  %83 = vmatpush1.msra.mxu0 %v42
  %84 = vmatprep.subr.mxu0 0.0
  %85 = vmatpush1.msra.mxu0 %v41
  %86 = vmatprep.subr.mxu0 0.0
  %87 = vmatpush1.msra.mxu0 %v40
  %88 = vmatprep.subr.mxu0 0.0
  %89 = vmatpush1.msra.mxu0 %v39
  %90 = vmatprep.subr.mxu0 0.0
  %91 = vmatpush1.msra.mxu0 %v38
  %92 = vmatprep.subr.mxu0 0.0
  %93 = vmatpush1.msra.mxu0 %v37
  %94 = vmatprep.subr.mxu0 0.0
  %95 = vmatpush1.msra.mxu0 %v36
  %96 = vmatprep.subr.mxu0 0.0
  %97 = vmatpush1.msra.mxu0 %v35
  %98 = vmatprep.subr.mxu0 0.0
  %99 = vmatpush1.msra.mxu0 %v34
  %100 = vmatprep.subr.mxu0 0.0
  %101 = vmatpush2.msra.mxu0 %v65
  %102 = vmatprep.subr.mxu0 0.0
  %103 = vmatpush2.msra.mxu0 %v64
  %104 = vmatprep.subr.mxu0 0.0
  %105 = vmatpush2.msra.mxu0 %v63
  %106 = vmatprep.subr.mxu0 0.0
  %107 = vmatpush2.msra.mxu0 %v62
  %108 = vmatprep.subr.mxu0 0.0
  %109 = vmatpush2.msra.mxu0 %v61
  %110 = vmatprep.subr.mxu0 0.0
  %111 = vmatpush2.msra.mxu0 %v60
  %112 = vmatprep.subr.mxu0 0.0
  %113 = vmatpush2.msra.mxu0 %v59
  %114 = vmatprep.subr.mxu0 0.0
  %115 = vmatpush2.msra.mxu0 %v58
  %116 = vmatprep.subr.mxu0 0.0
  %117 = vmatpush2.msra.mxu0 %v57
  %118 = vmatprep.subr.mxu0 0.0
  %119 = vmatpush2.msra.mxu0 %v56
  %120 = vmatprep.subr.mxu0 0.0
  %121 = vmatpush2.msra.mxu0 %v55
  %122 = vmatprep.subr.mxu0 0.0
  %123 = vmatpush2.msra.mxu0 %v54
  %124 = vmatprep.subr.mxu0 0.0
  %125 = vmatpush2.msra.mxu0 %v53
  %126 = vmatprep.subr.mxu0 0.0
  %127 = vmatpush2.msra.mxu0 %v52
  %128 = vmatprep.subr.mxu0 0.0
  %129 = vmatpush2.msra.mxu0 %v51
  %130 = vmatprep.subr.mxu0 0.0
  %131 = vmatpush2.msra.mxu0 %v50
  %132 = vmatprep.mubr.f32.mxu0 %v27
  %133 = vmatmul.mubr.f32.gmra.mxu0 %v26
  %v134 = vpop.f32.mrf.mxu0
  %v135 = vadd.f32 0.0, %v134
  %v136 = vpop.f32.mrf.mxu0
  %137 = vmatprep.mubr.f32.mxu0 %v29
  %138 = vmatmul.mubr.f32.gmra.mxu0 %v28
  %v139 = vpop.f32.mrf.mxu0
  %v140 = vadd.f32 0.0, %v139
  %v141 = vpop.f32.mrf.mxu0
  %142 = vmatprep.mubr.f32.mxu0 %v31
  %143 = vmatmul.mubr.f32.gmra.mxu0 %v30
  %v144 = vpop.f32.mrf.mxu0
  %v145 = vadd.f32 0.0, %v144
  %v146 = vpop.f32.mrf.mxu0
  %147 = vmatprep.mubr.f32.mxu0 %v33
  %148 = vmatmul.mubr.f32.gmra.mxu0 %v32
  %v149 = vpop.f32.mrf.mxu0
  %v150 = vadd.f32 0.0, %v149
  %v151 = vpop.f32.mrf.mxu0
  %152 = vdwg.mxu0
  %v153 = vadd.f32 %v135, %v140
  %v154 = vadd.f32 %v153, %v145
  %v155 = vadd.f32 %v154, %v150
  %v156 = vrot.slane %v155, 4
  %v157 = vadd.f32 %v155, %v156
  %v158 = vrot.slane %v157, 2
  %v159 = vadd.f32 %v157, %v158
  %v160 = vrot.slane %v159, 1
  %v161 = vadd.f32 %v159, %v160
  %v162 = vmul.f32 %v135, %v135
  %v163 = vmul.f32 %v140, %v140
  %v164 = vmul.f32 %v145, %v145
  %v165 = vmul.f32 %v150, %v150
  %v166 = vadd.f32 %v162, %v163
  %v167 = vadd.f32 %v166, %v164
  %v168 = vadd.f32 %v167, %v165
  %v169 = vrot.slane %v168, 4
  %v170 = vadd.f32 %v168, %v169
  %v171 = vrot.slane %v170, 2
  %v172 = vadd.f32 %v170, %v171
  %v173 = vrot.slane %v172, 1
  %v174 = vadd.f32 %v172, %v173
  %v175 = vrcp.pop 32.0
  %v176 = vmul.f32 %v161, %v175
  %v177 = vmul.f32 %v174, %v175
  %v178 = vmul.f32 %v176, %v176
  %v179 = vsub.f32 %v177, %v178
  %v180 = vmax.f32 %v179, 0.0
  %v181 = vadd.f32 %v180, 1e-05
  %v182 = vrsqrt.pop %v181
  %v183 = vmul.f32 %v66, %v182
  %v184 = vmul.f32 %v176, %v183
  %v185 = vsub.f32 %v67, %v184
  %v186 = vlaneseq
  %v187 = vshrl.u32 %v186, 7
  %v188 = vsub.s32 0, %v187
  %v189 = vrot.slane %v183, %v188
  %v190 = vmul.f32 %v135, %v189
  %v191 = vmul.f32 %v140, %v189
  %v192 = vmul.f32 %v145, %v189
  %v193 = vmul.f32 %v150, %v189
  %v194 = vlaneseq
  %v195 = vshrl.u32 %v194, 7
  %v196 = vsub.s32 0, %v195
  %v197 = vrot.slane %v185, %v196
  %v198 = vadd.f32 %v190, %v197
  %v199 = vadd.f32 %v191, %v197
  %v200 = vadd.f32 %v192, %v197
  %v201 = vadd.f32 %v193, %v197
  %v202 = vmax.f32 %v198, 0.0
  %v203 = vmax.f32 %v199, 0.0
  %v204 = vmax.f32 %v200, 0.0
  %v205 = vmax.f32 %v201, 0.0
  %v206 = vld [vmem:[%s2] sm:$0xff]
  %v207 = vld [vmem:[%s2 + $0x8] sm:$0xff]
  %v208 = vld [vmem:[%s2 + $0x10] sm:$0xff]
  %v209 = vld [vmem:[%s2 + $0x18] sm:$0xff]
  %v210 = vld [vmem:[%s2 + $0x20] sm:$0xff]
  %v211 = vld [vmem:[%s2 + $0x28] sm:$0xff]
  %v212 = vld [vmem:[%s2 + $0x30] sm:$0xff]
  %v213 = vld [vmem:[%s2 + $0x38] sm:$0xff]
  %v214 = vld [vmem:[%s2 + $0x40] sm:$0xff]
  %v215 = vld [vmem:[%s2 + $0x48] sm:$0xff]
  %v216 = vld [vmem:[%s2 + $0x50] sm:$0xff]
  %v217 = vld [vmem:[%s2 + $0x58] sm:$0xff]
  %v218 = vld [vmem:[%s2 + $0x60] sm:$0xff]
  %v219 = vld [vmem:[%s2 + $0x68] sm:$0xff]
  %v220 = vld [vmem:[%s2 + $0x70] sm:$0xff]
  %v221 = vld [vmem:[%s2 + $0x78] sm:$0xff]
  %v222 = vld [vmem:[%s2 + $0x80] sm:$0xff]
  %v223 = vld [vmem:[%s2 + $0x88] sm:$0xff]
  %v224 = vld [vmem:[%s2 + $0x90] sm:$0xff]
  %v225 = vld [vmem:[%s2 + $0x98] sm:$0xff]
  %v226 = vld [vmem:[%s2 + $0xa0] sm:$0xff]
  %v227 = vld [vmem:[%s2 + $0xa8] sm:$0xff]
  %v228 = vld [vmem:[%s2 + $0xb0] sm:$0xff]
  %v229 = vld [vmem:[%s2 + $0xb8] sm:$0xff]
  %v230 = vld [vmem:[%s2 + $0xc0] sm:$0xff]
  %v231 = vld [vmem:[%s2 + $0xc8] sm:$0xff]
  %v232 = vld [vmem:[%s2 + $0xd0] sm:$0xff]
  %v233 = vld [vmem:[%s2 + $0xd8] sm:$0xff]
  %v234 = vld [vmem:[%s2 + $0xe0] sm:$0xff]
  %v235 = vld [vmem:[%s2 + $0xe8] sm:$0xff]
  %v236 = vld [vmem:[%s2 + $0xf0] sm:$0xff]
  %v237 = vld [vmem:[%s2 + $0xf8] sm:$0xff]
  %v238 = vld [vmem:[%s5 + $0x2] sm:$0x1]
  %v239 = vld [vmem:[%s5 + $0x3] sm:$0x1]
  %240 = vmatprep.subr.mxu0 %v237
  %241 = vmatpush1.msra.mxu0 %v236
  %242 = vmatprep.subr.mxu0 %v235
  %243 = vmatpush1.msra.mxu0 %v234
  %244 = vmatprep.subr.mxu0 %v233
  %245 = vmatpush1.msra.mxu0 %v232
  %246 = vmatprep.subr.mxu0 %v231
  %247 = vmatpush1.msra.mxu0 %v230
  %248 = vmatprep.subr.mxu0 %v229
  %249 = vmatpush1.msra.mxu0 %v228
  %250 = vmatprep.subr.mxu0 %v227
  %251 = vmatpush1.msra.mxu0 %v226
  %252 = vmatprep.subr.mxu0 %v225
  %253 = vmatpush1.msra.mxu0 %v224
  %254 = vmatprep.subr.mxu0 %v223
  %255 = vmatpush1.msra.mxu0 %v222
  %256 = vmatprep.subr.mxu0 %v221
  %257 = vmatpush1.msra.mxu0 %v220
  %258 = vmatprep.subr.mxu0 %v219
  %259 = vmatpush1.msra.mxu0 %v218
  %260 = vmatprep.subr.mxu0 %v217
  %261 = vmatpush1.msra.mxu0 %v216
  %262 = vmatprep.subr.mxu0 %v215
  %263 = vmatpush1.msra.mxu0 %v214
  %264 = vmatprep.subr.mxu0 %v213
  %265 = vmatpush1.msra.mxu0 %v212
  %266 = vmatprep.subr.mxu0 %v211
  %267 = vmatpush1.msra.mxu0 %v210
  %268 = vmatprep.subr.mxu0 %v209
  %269 = vmatpush1.msra.mxu0 %v208
  %270 = vmatprep.subr.mxu0 %v207
  %271 = vmatpush1.msra.mxu0 %v206
  %272 = vmatprep.subr.mxu0 0.0
  %273 = vmatpush2.msra.mxu0 0.0
  %274 = vmatprep.subr.mxu0 0.0
  %275 = vmatpush2.msra.mxu0 0.0
  %276 = vmatprep.subr.mxu0 0.0
  %277 = vmatpush2.msra.mxu0 0.0
  %278 = vmatprep.subr.mxu0 0.0
  %279 = vmatpush2.msra.mxu0 0.0
  %280 = vmatprep.subr.mxu0 0.0
  %281 = vmatpush2.msra.mxu0 0.0
  %282 = vmatprep.subr.mxu0 0.0
  %283 = vmatpush2.msra.mxu0 0.0
  %284 = vmatprep.subr.mxu0 0.0
  %285 = vmatpush2.msra.mxu0 0.0
  %286 = vmatprep.subr.mxu0 0.0
  %287 = vmatpush2.msra.mxu0 0.0
  %288 = vmatprep.subr.mxu0 0.0
  %289 = vmatpush2.msra.mxu0 0.0
  %290 = vmatprep.subr.mxu0 0.0
  %291 = vmatpush2.msra.mxu0 0.0
  %292 = vmatprep.subr.mxu0 0.0
  %293 = vmatpush2.msra.mxu0 0.0
  %294 = vmatprep.subr.mxu0 0.0
  %295 = vmatpush2.msra.mxu0 0.0
  %296 = vmatprep.subr.mxu0 0.0
  %297 = vmatpush2.msra.mxu0 0.0
  %298 = vmatprep.subr.mxu0 0.0
  %299 = vmatpush2.msra.mxu0 0.0
  %300 = vmatprep.subr.mxu0 0.0
  %301 = vmatpush2.msra.mxu0 0.0
  %302 = vmatprep.subr.mxu0 0.0
  %303 = vmatpush2.msra.mxu0 0.0
  %304 = vmatprep.mubr.f32.mxu0 0.0
  %305 = vmatmul.mubr.f32.gmra.mxu0 %v202
  %v306 = vpop.f32.mrf.mxu0
  %v307 = vadd.f32 0.0, %v306
  %v308 = vpop.f32.mrf.mxu0
  %v309 = vadd.f32 0.0, %v308
  %310 = vmatprep.mubr.f32.mxu0 0.0
  %311 = vmatmul.mubr.f32.gmra.mxu0 %v203
  %v312 = vpop.f32.mrf.mxu0
  %v313 = vadd.f32 0.0, %v312
  %v314 = vpop.f32.mrf.mxu0
  %v315 = vadd.f32 0.0, %v314
  %316 = vmatprep.mubr.f32.mxu0 0.0
  %317 = vmatmul.mubr.f32.gmra.mxu0 %v204
  %v318 = vpop.f32.mrf.mxu0
  %v319 = vadd.f32 0.0, %v318
  %v320 = vpop.f32.mrf.mxu0
  %v321 = vadd.f32 0.0, %v320
  %322 = vmatprep.mubr.f32.mxu0 0.0
  %323 = vmatmul.mubr.f32.gmra.mxu0 %v205
  %v324 = vpop.f32.mrf.mxu0
  %v325 = vadd.f32 0.0, %v324
  %v326 = vpop.f32.mrf.mxu0
  %v327 = vadd.f32 0.0, %v326
  %328 = vdwg.mxu0
  %v329 = vadd.f32 %v307, %v313
  %v330 = vadd.f32 %v329, %v319
  %v331 = vadd.f32 %v330, %v325
  %v332 = vrot.slane %v331, 4
  %v333 = vadd.f32 %v331, %v332
  %v334 = vrot.slane %v333, 2
  %v335 = vadd.f32 %v333, %v334
  %v336 = vrot.slane %v335, 1
  %v337 = vadd.f32 %v335, %v336
  %v338 = vadd.f32 %v309, %v315
  %v339 = vadd.f32 %v338, %v321
  %v340 = vadd.f32 %v339, %v327
  %v341 = vrot.slane %v340, 4
  %v342 = vadd.f32 %v340, %v341
  %v343 = vrot.slane %v342, 2
  %v344 = vadd.f32 %v342, %v343
  %v345 = vrot.slane %v344, 1
  %v346 = vadd.f32 %v344, %v345
  %v347 = vmul.f32 %v307, %v307
  %v348 = vmul.f32 %v309, %v309
  %v349 = vmul.f32 %v313, %v313
  %v350 = vmul.f32 %v315, %v315
  %v351 = vmul.f32 %v319, %v319
  %v352 = vmul.f32 %v321, %v321
  %v353 = vmul.f32 %v325, %v325
  %v354 = vmul.f32 %v327, %v327
  %v355 = vadd.f32 %v347, %v349
  %v356 = vadd.f32 %v355, %v351
  %v357 = vadd.f32 %v356, %v353
  %v358 = vrot.slane %v357, 4
  %v359 = vadd.f32 %v357, %v358
  %v360 = vrot.slane %v359, 2
  %v361 = vadd.f32 %v359, %v360
  %v362 = vrot.slane %v361, 1
  %v363 = vadd.f32 %v361, %v362
  %v364 = vadd.f32 %v348, %v350
  %v365 = vadd.f32 %v364, %v352
  %v366 = vadd.f32 %v365, %v354
  %v367 = vrot.slane %v366, 4
  %v368 = vadd.f32 %v366, %v367
  %v369 = vrot.slane %v368, 2
  %v370 = vadd.f32 %v368, %v369
  %v371 = vrot.slane %v370, 1
  %v372 = vadd.f32 %v370, %v371
  %v373 = vadd.f32 %v337, 0.0
  %375 = vrot.lane.b32.xlu0 %v337, 64
  %v376 = vpop.permute.xlu0 %375
  %v378 = vadd.f32 %v373, %v376
  %v379 = vadd.f32 %v378, %v346
  %381 = vrot.lane.b32.xlu0 %v346, 64
  %v382 = vpop.permute.xlu0 %381
  %v384 = vadd.f32 %v379, %v382
  %v385 = vadd.f32 %v363, 0.0
  %387 = vrot.lane.b32.xlu0 %v363, 64
  %v388 = vpop.permute.xlu0 %387
  %v390 = vadd.f32 %v385, %v388
  %v391 = vadd.f32 %v390, %v372
  %393 = vrot.lane.b32.xlu0 %v372, 64
  %v394 = vpop.permute.xlu0 %393
  %v396 = vadd.f32 %v391, %v394
  %v397 = vrcp.pop 128.0
  %v398 = vmul.f32 %v384, %v397
  %v399 = vmul.f32 %v396, %v397
  %v400 = vmul.f32 %v398, %v398
  %v401 = vsub.f32 %v399, %v400
  %v402 = vmax.f32 %v401, 0.0
  %v403 = vadd.f32 %v402, 1e-05
  %v404 = vrsqrt.pop %v403
  %v405 = vmul.f32 %v238, %v404
  %v406 = vmul.f32 %v398, %v405
  %v407 = vsub.f32 %v239, %v406
  %v408 = vlaneseq
  %v409 = vshrl.u32 %v408, 7
  %v410 = vsub.s32 0, %v409
  %v411 = vrot.slane %v405, %v410
  %v412 = vmul.f32 %v307, %v411
  %v413 = vmul.f32 %v313, %v411
  %v414 = vmul.f32 %v319, %v411
  %v415 = vmul.f32 %v325, %v411
  %v416 = vlaneseq
  %v417 = vshrl.u32 %v416, 7
  %v418 = vsub.s32 0, %v417
  %v419 = vrot.slane %v407, %v418
  %v420 = vadd.f32 %v412, %v419
  %v421 = vadd.f32 %v413, %v419
  %v422 = vadd.f32 %v414, %v419
  %v423 = vadd.f32 %v415, %v419
  %v424 = vmax.f32 %v420, 0.0
  %v425 = vmax.f32 %v421, 0.0
  %v426 = vmax.f32 %v422, 0.0
  %v427 = vmax.f32 %v423, 0.0
  %429 = vrot.lane.b32.xlu0 %v411, 64
  %v430 = vpop.permute.xlu0 %429
  %v432 = vmul.f32 %v307, %v430
  %v433 = vmul.f32 %v313, %v430
  %v434 = vmul.f32 %v319, %v430
  %v435 = vmul.f32 %v325, %v430
  %437 = vrot.lane.b32.xlu0 %v419, 64
  %v438 = vpop.permute.xlu0 %437
  %v440 = vadd.f32 %v432, %v438
  %v441 = vadd.f32 %v433, %v438
  %v442 = vadd.f32 %v434, %v438
  %v443 = vadd.f32 %v435, %v438
  %v444 = vmax.f32 %v440, 0.0
  %v445 = vmax.f32 %v441, 0.0
  %v446 = vmax.f32 %v442, 0.0
  %v447 = vmax.f32 %v443, 0.0
  %v448 = vmul.f32 %v309, %v411
  %v449 = vmul.f32 %v315, %v411
  %v450 = vmul.f32 %v321, %v411
  %v451 = vmul.f32 %v327, %v411
  %v452 = vadd.f32 %v448, %v419
  %v453 = vadd.f32 %v449, %v419
  %v454 = vadd.f32 %v450, %v419
  %v455 = vadd.f32 %v451, %v419
  %v456 = vmax.f32 %v452, 0.0
  %v457 = vmax.f32 %v453, 0.0
  %v458 = vmax.f32 %v454, 0.0
  %v459 = vmax.f32 %v455, 0.0
  %v460 = vmul.f32 %v309, %v430
  %v461 = vmul.f32 %v315, %v430
  %v462 = vmul.f32 %v321, %v430
  %v463 = vmul.f32 %v327, %v430
  %v464 = vadd.f32 %v460, %v438
  %v465 = vadd.f32 %v461, %v438
  %v466 = vadd.f32 %v462, %v438
  %v467 = vadd.f32 %v463, %v438
  %v468 = vmax.f32 %v464, 0.0
  %v469 = vmax.f32 %v465, 0.0
  %v470 = vmax.f32 %v466, 0.0
  %v471 = vmax.f32 %v467, 0.0
  %476 = vrot.lane.b32.xlu0 %v444, 64
  %v477 = vpop.permute.xlu0 %476
  %478 = vrot.lane.b32.xlu0 %v445, 64
  %v479 = vpop.permute.xlu0 %478
  %480 = vrot.lane.b32.xlu0 %v446, 64
  %v481 = vpop.permute.xlu0 %480
  %482 = vrot.lane.b32.xlu0 %v447, 64
  %v483 = vpop.permute.xlu0 %482
  %488 = vrot.lane.b32.xlu0 %v468, 64
  %v489 = vpop.permute.xlu0 %488
  %490 = vrot.lane.b32.xlu0 %v469, 64
  %v491 = vpop.permute.xlu0 %490
  %492 = vrot.lane.b32.xlu0 %v470, 64
  %v493 = vpop.permute.xlu0 %492
  %494 = vrot.lane.b32.xlu0 %v471, 64
  %v495 = vpop.permute.xlu0 %494
  %v496 = vld [vmem:[%s3] sm:$0xff]
  %v497 = vld [vmem:[%s3 + $0x8] sm:$0xff]
  %v498 = vld [vmem:[%s3 + $0x10] sm:$0xff]
  %v499 = vld [vmem:[%s3 + $0x18] sm:$0xff]
  %v500 = vld [vmem:[%s3 + $0x20] sm:$0xff]
  %v501 = vld [vmem:[%s3 + $0x28] sm:$0xff]
  %v502 = vld [vmem:[%s3 + $0x30] sm:$0xff]
  %v503 = vld [vmem:[%s3 + $0x38] sm:$0xff]
  %vm504 = vcmask 523264
  %v506 = vsel %vm504, %v424, 0
  %v509 = vsel %vm504, %v425, 0
  %v512 = vsel %vm504, %v426, 0
  %v515 = vsel %vm504, %v427, 0
  %v517 = vsel %vm504, %v477, 0
  %v519 = vsel %vm504, %v479, 0
  %v521 = vsel %vm504, %v481, 0
  %v523 = vsel %vm504, %v483, 0
  %v526 = vsel %vm504, %v456, 0
  %v529 = vsel %vm504, %v457, 0
  %v532 = vsel %vm504, %v458, 0
  %v535 = vsel %vm504, %v459, 0
  %v537 = vsel %vm504, %v489, 0
  %v539 = vsel %vm504, %v491, 0
  %v541 = vsel %vm504, %v493, 0
  %v543 = vsel %vm504, %v495, 0
  %545 = vmatprep.subr.mxu0 0.0
  %546 = vmatpush1.msra.mxu0 0.0
  %547 = vmatprep.subr.mxu0 0.0
  %548 = vmatpush1.msra.mxu0 0.0
  %549 = vmatprep.subr.mxu0 0.0
  %550 = vmatpush1.msra.mxu0 0.0
  %551 = vmatprep.subr.mxu0 0.0
  %552 = vmatpush1.msra.mxu0 0.0
  %553 = vmatprep.subr.mxu0 0.0
  %554 = vmatpush1.msra.mxu0 0.0
  %555 = vmatprep.subr.mxu0 0.0
  %556 = vmatpush1.msra.mxu0 0.0
  %557 = vmatprep.subr.mxu0 0.0
  %558 = vmatpush1.msra.mxu0 0.0
  %559 = vmatprep.subr.mxu0 0.0
  %560 = vmatpush1.msra.mxu0 0.0
  %561 = vmatprep.subr.mxu0 0.0
  %562 = vmatpush1.msra.mxu0 %v503
  %563 = vmatprep.subr.mxu0 0.0
  %564 = vmatpush1.msra.mxu0 %v502
  %565 = vmatprep.subr.mxu0 0.0
  %566 = vmatpush1.msra.mxu0 %v501
  %567 = vmatprep.subr.mxu0 0.0
  %568 = vmatpush1.msra.mxu0 %v500
  %569 = vmatprep.subr.mxu0 0.0
  %570 = vmatpush1.msra.mxu0 %v499
  %571 = vmatprep.subr.mxu0 0.0
  %572 = vmatpush1.msra.mxu0 %v498
  %573 = vmatprep.subr.mxu0 0.0
  %574 = vmatpush1.msra.mxu0 %v497
  %575 = vmatprep.subr.mxu0 0.0
  %576 = vmatpush1.msra.mxu0 %v496
  %577 = vmatprep.subr.mxu0 0.0
  %578 = vmatpush2.msra.mxu0 0.0
  %579 = vmatprep.subr.mxu0 0.0
  %580 = vmatpush2.msra.mxu0 0.0
  %581 = vmatprep.subr.mxu0 0.0
  %582 = vmatpush2.msra.mxu0 0.0
  %583 = vmatprep.subr.mxu0 0.0
  %584 = vmatpush2.msra.mxu0 0.0
  %585 = vmatprep.subr.mxu0 0.0
  %586 = vmatpush2.msra.mxu0 0.0
  %587 = vmatprep.subr.mxu0 0.0
  %588 = vmatpush2.msra.mxu0 0.0
  %589 = vmatprep.subr.mxu0 0.0
  %590 = vmatpush2.msra.mxu0 0.0
  %591 = vmatprep.subr.mxu0 0.0
  %592 = vmatpush2.msra.mxu0 0.0
  %593 = vmatprep.subr.mxu0 0.0
  %594 = vmatpush2.msra.mxu0 0.0
  %595 = vmatprep.subr.mxu0 0.0
  %596 = vmatpush2.msra.mxu0 0.0
  %597 = vmatprep.subr.mxu0 0.0
  %598 = vmatpush2.msra.mxu0 0.0
  %599 = vmatprep.subr.mxu0 0.0
  %600 = vmatpush2.msra.mxu0 0.0
  %601 = vmatprep.subr.mxu0 0.0
  %602 = vmatpush2.msra.mxu0 0.0
  %603 = vmatprep.subr.mxu0 0.0
  %604 = vmatpush2.msra.mxu0 0.0
  %605 = vmatprep.subr.mxu0 0.0
  %606 = vmatpush2.msra.mxu0 0.0
  %607 = vmatprep.subr.mxu0 0.0
  %608 = vmatpush2.msra.mxu0 0.0
  %609 = vmatprep.mubr.f32.mxu0 0.0
  %610 = vmatmul.mubr.f32.gmra.mxu0 %v506
  %v611 = vpop.f32.mrf.mxu0
  %v612 = vadd.f32 0.0, %v611
  %v613 = vpop.f32.mrf.mxu0
  %614 = vmatprep.mubr.f32.mxu0 0.0
  %615 = vmatmul.mubr.f32.gmra.mxu0 %v509
  %v616 = vpop.f32.mrf.mxu0
  %v617 = vadd.f32 0.0, %v616
  %v618 = vpop.f32.mrf.mxu0
  %619 = vmatprep.mubr.f32.mxu0 0.0
  %620 = vmatmul.mubr.f32.gmra.mxu0 %v512
  %v621 = vpop.f32.mrf.mxu0
  %v622 = vadd.f32 0.0, %v621
  %v623 = vpop.f32.mrf.mxu0
  %624 = vmatprep.mubr.f32.mxu0 0.0
  %625 = vmatmul.mubr.f32.gmra.mxu0 %v515
  %v626 = vpop.f32.mrf.mxu0
  %v627 = vadd.f32 0.0, %v626
  %v628 = vpop.f32.mrf.mxu0
  %629 = vmatprep.mubr.f32.mxu0 0.0
  %630 = vmatmul.mubr.f32.gmra.mxu0 %v517
  %v631 = vpop.f32.mrf.mxu0
  %v632 = vadd.f32 0.0, %v631
  %v633 = vpop.f32.mrf.mxu0
  %634 = vmatprep.mubr.f32.mxu0 0.0
  %635 = vmatmul.mubr.f32.gmra.mxu0 %v519
  %v636 = vpop.f32.mrf.mxu0
  %v637 = vadd.f32 0.0, %v636
  %v638 = vpop.f32.mrf.mxu0
  %639 = vmatprep.mubr.f32.mxu0 0.0
  %640 = vmatmul.mubr.f32.gmra.mxu0 %v521
  %v641 = vpop.f32.mrf.mxu0
  %v642 = vadd.f32 0.0, %v641
  %v643 = vpop.f32.mrf.mxu0
  %644 = vmatprep.mubr.f32.mxu0 0.0
  %645 = vmatmul.mubr.f32.gmra.mxu0 %v523
  %v646 = vpop.f32.mrf.mxu0
  %v647 = vadd.f32 0.0, %v646
  %v648 = vpop.f32.mrf.mxu0
  %649 = vmatprep.mubr.f32.mxu0 0.0
  %650 = vmatmul.mubr.f32.gmra.mxu0 %v526
  %v651 = vpop.f32.mrf.mxu0
  %v652 = vadd.f32 0.0, %v651
  %v653 = vpop.f32.mrf.mxu0
  %654 = vmatprep.mubr.f32.mxu0 0.0
  %655 = vmatmul.mubr.f32.gmra.mxu0 %v529
  %v656 = vpop.f32.mrf.mxu0
  %v657 = vadd.f32 0.0, %v656
  %v658 = vpop.f32.mrf.mxu0
  %659 = vmatprep.mubr.f32.mxu0 0.0
  %660 = vmatmul.mubr.f32.gmra.mxu0 %v532
  %v661 = vpop.f32.mrf.mxu0
  %v662 = vadd.f32 0.0, %v661
  %v663 = vpop.f32.mrf.mxu0
  %664 = vmatprep.mubr.f32.mxu0 0.0
  %665 = vmatmul.mubr.f32.gmra.mxu0 %v535
  %v666 = vpop.f32.mrf.mxu0
  %v667 = vadd.f32 0.0, %v666
  %v668 = vpop.f32.mrf.mxu0
  %669 = vmatprep.mubr.f32.mxu0 0.0
  %670 = vmatmul.mubr.f32.gmra.mxu0 %v537
  %v671 = vpop.f32.mrf.mxu0
  %v672 = vadd.f32 0.0, %v671
  %v673 = vpop.f32.mrf.mxu0
  %674 = vmatprep.mubr.f32.mxu0 0.0
  %675 = vmatmul.mubr.f32.gmra.mxu0 %v539
  %v676 = vpop.f32.mrf.mxu0
  %v677 = vadd.f32 0.0, %v676
  %v678 = vpop.f32.mrf.mxu0
  %679 = vmatprep.mubr.f32.mxu0 0.0
  %680 = vmatmul.mubr.f32.gmra.mxu0 %v541
  %v681 = vpop.f32.mrf.mxu0
  %v682 = vadd.f32 0.0, %v681
  %v683 = vpop.f32.mrf.mxu0
  %684 = vmatprep.mubr.f32.mxu0 0.0
  %685 = vmatmul.mubr.f32.gmra.mxu0 %v543
  %v686 = vpop.f32.mrf.mxu0
  %v687 = vadd.f32 0.0, %v686
  %v688 = vpop.f32.mrf.mxu0
  %689 = vdwg.mxu0
  %v690 = vadd.f32 %v612, %v617
  %v691 = vadd.f32 %v690, %v622
  %v692 = vadd.f32 %v691, %v627
  %v693 = vadd.f32 %v692, %v632
  %v694 = vadd.f32 %v693, %v637
  %v695 = vadd.f32 %v694, %v642
  %v696 = vadd.f32 %v695, %v647
  %v697 = vadd.f32 %v696, %v652
  %v698 = vadd.f32 %v697, %v657
  %v699 = vadd.f32 %v698, %v662
  %v700 = vadd.f32 %v699, %v667
  %v701 = vadd.f32 %v700, %v672
  %v702 = vadd.f32 %v701, %v677
  %v703 = vadd.f32 %v702, %v682
  %v704 = vadd.f32 %v703, %v687
  %v705 = vrot.slane %v704, 4
  %v706 = vadd.f32 %v704, %v705
  %v707 = vrot.slane %v706, 2
  %v708 = vadd.f32 %v706, %v707
  %v709 = vrot.slane %v708, 1
  %v710 = vadd.f32 %v708, %v709
  %v711 = vmul.f32 %v612, %v612
  %v712 = vmul.f32 %v617, %v617
  %v713 = vmul.f32 %v622, %v622
  %v714 = vmul.f32 %v627, %v627
  %v715 = vmul.f32 %v632, %v632
  %v716 = vmul.f32 %v637, %v637
  %v717 = vmul.f32 %v642, %v642
  %v718 = vmul.f32 %v647, %v647
  %v719 = vmul.f32 %v652, %v652
  %v720 = vmul.f32 %v657, %v657
  %v721 = vmul.f32 %v662, %v662
  %v722 = vmul.f32 %v667, %v667
  %v723 = vmul.f32 %v672, %v672
  %v724 = vmul.f32 %v677, %v677
  %v725 = vmul.f32 %v682, %v682
  %v726 = vmul.f32 %v687, %v687
  %v727 = vadd.f32 %v711, %v712
  %v728 = vadd.f32 %v727, %v713
  %v729 = vadd.f32 %v728, %v714
  %v730 = vadd.f32 %v729, %v715
  %v731 = vadd.f32 %v730, %v716
  %v732 = vadd.f32 %v731, %v717
  %v733 = vadd.f32 %v732, %v718
  %v734 = vadd.f32 %v733, %v719
  %v735 = vadd.f32 %v734, %v720
  %v736 = vadd.f32 %v735, %v721
  %v737 = vadd.f32 %v736, %v722
  %v738 = vadd.f32 %v737, %v723
  %v739 = vadd.f32 %v738, %v724
  %v740 = vadd.f32 %v739, %v725
  %v741 = vadd.f32 %v740, %v726
  %v742 = vrot.slane %v741, 4
  %v743 = vadd.f32 %v741, %v742
  %v744 = vrot.slane %v743, 2
  %v745 = vadd.f32 %v743, %v744
  %v746 = vrot.slane %v745, 1
  %v747 = vadd.f32 %v745, %v746
  %v748 = vadd.f32 %v710, 0.0
  %750 = vrot.lane.b32.xlu0 %v710, 96
  %v751 = vpop.permute.xlu0 %750
  %v753 = vadd.f32 %v748, %v751
  %754 = vrot.lane.b32.xlu0 %v710, 64
  %v755 = vpop.permute.xlu0 %754
  %v757 = vadd.f32 %v753, %v755
  %758 = vrot.lane.b32.xlu0 %v710, 32
  %v759 = vpop.permute.xlu0 %758
  %v761 = vadd.f32 %v757, %v759
  %v762 = vadd.f32 %v747, 0.0
  %764 = vrot.lane.b32.xlu0 %v747, 96
  %v765 = vpop.permute.xlu0 %764
  %v767 = vadd.f32 %v762, %v765
  %768 = vrot.lane.b32.xlu0 %v747, 64
  %v769 = vpop.permute.xlu0 %768
  %v771 = vadd.f32 %v767, %v769
  %772 = vrot.lane.b32.xlu0 %v747, 32
  %v773 = vpop.permute.xlu0 %772
  %v775 = vadd.f32 %v771, %v773
  %v776 = vrcp.pop 512.0
  %v777 = vmul.f32 %v761, %v776
  %v778 = vmul.f32 %v775, %v776
  %v779 = vmul.f32 %v777, %v777
  %v780 = vsub.f32 %v778, %v779
  %v781 = vmax.f32 %v780, 0.0
  %v782 = vadd.f32 %v781, 1e-05
  %v783 = vrsqrt.pop %v782
  %v786 = vunpack.c.l.s4 1983009808
  %v787 = vunpack.c.0.s8 %v786
  %v788 = vlaneseq
  %v789 = vshrl.u32 %v788, 7
  %v790 = vsub.s32 %v787, %v789
  %v791 = vrot.slane %v783, %v790
  %792 = vrot.lane.b32.xlu0 %v791, 64
  %v793 = vpop.permute.xlu0 %792
  %v795 = vmul.f32 %v238, %v793
  %v797 = vlaneseq
  %v798 = vshrl.u32 %v797, 7
  %v799 = vsub.s32 0, %v798
  %v800 = vrot.slane %v795, %v799
  %801 = vrot.lane.b32.xlu0 %v800, 64
  %v802 = vpop.permute.xlu0 %801
  %v804 = vmul.f32 %v777, %v802
  %v807 = vunpack.c.l.s4 1983009808
  %v808 = vunpack.c.0.s8 %v807
  %v809 = vlaneseq
  %v810 = vshrl.u32 %v809, 7
  %v811 = vsub.s32 %v808, %v810
  %v812 = vrot.slane %v804, %v811
  %813 = vrot.lane.b32.xlu0 %v812, 64
  %v814 = vpop.permute.xlu0 %813
  %v816 = vsub.f32 %v239, %v814
  %v817 = vlaneseq
  %v818 = vshrl.u32 %v817, 7
  %v819 = vsub.s32 0, %v818
  %v820 = vrot.slane %v795, %v819
  %822 = vrot.lane.b32.xlu0 %v820, 64
  %v823 = vpop.permute.xlu0 %822
  %v825 = vmul.f32 %v612, %v823
  %v826 = vmul.f32 %v617, %v823
  %v827 = vmul.f32 %v622, %v823
  %v828 = vmul.f32 %v627, %v823
  %v829 = vmul.f32 %v632, %v823
  %v830 = vmul.f32 %v637, %v823
  %v831 = vmul.f32 %v642, %v823
  %v832 = vmul.f32 %v647, %v823
  %v833 = vmul.f32 %v652, %v823
  %v834 = vmul.f32 %v657, %v823
  %v835 = vmul.f32 %v662, %v823
  %v836 = vmul.f32 %v667, %v823
  %v837 = vmul.f32 %v672, %v823
  %v838 = vmul.f32 %v677, %v823
  %v839 = vmul.f32 %v682, %v823
  %v840 = vmul.f32 %v687, %v823
  %v841 = vlaneseq
  %v842 = vshrl.u32 %v841, 7
  %v843 = vsub.s32 0, %v842
  %v844 = vrot.slane %v816, %v843
  %846 = vrot.lane.b32.xlu0 %v844, 64
  %v847 = vpop.permute.xlu0 %846
  %v849 = vadd.f32 %v825, %v847
  %v850 = vadd.f32 %v826, %v847
  %v851 = vadd.f32 %v827, %v847
  %v852 = vadd.f32 %v828, %v847
  %v853 = vadd.f32 %v829, %v847
  %v854 = vadd.f32 %v830, %v847
  %v855 = vadd.f32 %v831, %v847
  %v856 = vadd.f32 %v832, %v847
  %v857 = vadd.f32 %v833, %v847
  %v858 = vadd.f32 %v834, %v847
  %v859 = vadd.f32 %v835, %v847
  %v860 = vadd.f32 %v836, %v847
  %v861 = vadd.f32 %v837, %v847
  %v862 = vadd.f32 %v838, %v847
  %v863 = vadd.f32 %v839, %v847
  %v864 = vadd.f32 %v840, %v847
  %v865 = vmax.f32 %v849, 0.0
  %v866 = vmax.f32 %v850, 0.0
  %v867 = vmax.f32 %v851, 0.0
  %v868 = vmax.f32 %v852, 0.0
  %v869 = vmax.f32 %v853, 0.0
  %v870 = vmax.f32 %v854, 0.0
  %v871 = vmax.f32 %v855, 0.0
  %v872 = vmax.f32 %v856, 0.0
  %v873 = vmax.f32 %v857, 0.0
  %v874 = vmax.f32 %v858, 0.0
  %v875 = vmax.f32 %v859, 0.0
  %v876 = vmax.f32 %v860, 0.0
  %v877 = vmax.f32 %v861, 0.0
  %v878 = vmax.f32 %v862, 0.0
  %v879 = vmax.f32 %v863, 0.0
  %v880 = vmax.f32 %v864, 0.0
  %881 = vrot.lane.b32.xlu0 %v820, 96
  %v882 = vpop.permute.xlu0 %881
  %v884 = vmul.f32 %v612, %v882
  %v885 = vmul.f32 %v617, %v882
  %v886 = vmul.f32 %v622, %v882
  %v887 = vmul.f32 %v627, %v882
  %v888 = vmul.f32 %v632, %v882
  %v889 = vmul.f32 %v637, %v882
  %v890 = vmul.f32 %v642, %v882
  %v891 = vmul.f32 %v647, %v882
  %v892 = vmul.f32 %v652, %v882
  %v893 = vmul.f32 %v657, %v882
  %v894 = vmul.f32 %v662, %v882
  %v895 = vmul.f32 %v667, %v882
  %v896 = vmul.f32 %v672, %v882
  %v897 = vmul.f32 %v677, %v882
  %v898 = vmul.f32 %v682, %v882
  %v899 = vmul.f32 %v687, %v882
  %900 = vrot.lane.b32.xlu0 %v844, 96
  %v901 = vpop.permute.xlu0 %900
  %v903 = vadd.f32 %v884, %v901
  %v904 = vadd.f32 %v885, %v901
  %v905 = vadd.f32 %v886, %v901
  %v906 = vadd.f32 %v887, %v901
  %v907 = vadd.f32 %v888, %v901
  %v908 = vadd.f32 %v889, %v901
  %v909 = vadd.f32 %v890, %v901
  %v910 = vadd.f32 %v891, %v901
  %v911 = vadd.f32 %v892, %v901
  %v912 = vadd.f32 %v893, %v901
  %v913 = vadd.f32 %v894, %v901
  %v914 = vadd.f32 %v895, %v901
  %v915 = vadd.f32 %v896, %v901
  %v916 = vadd.f32 %v897, %v901
  %v917 = vadd.f32 %v898, %v901
  %v918 = vadd.f32 %v899, %v901
  %v919 = vmax.f32 %v903, 0.0
  %v920 = vmax.f32 %v904, 0.0
  %v921 = vmax.f32 %v905, 0.0
  %v922 = vmax.f32 %v906, 0.0
  %v923 = vmax.f32 %v907, 0.0
  %v924 = vmax.f32 %v908, 0.0
  %v925 = vmax.f32 %v909, 0.0
  %v926 = vmax.f32 %v910, 0.0
  %v927 = vmax.f32 %v911, 0.0
  %v928 = vmax.f32 %v912, 0.0
  %v929 = vmax.f32 %v913, 0.0
  %v930 = vmax.f32 %v914, 0.0
  %v931 = vmax.f32 %v915, 0.0
  %v932 = vmax.f32 %v916, 0.0
  %v933 = vmax.f32 %v917, 0.0
  %v934 = vmax.f32 %v918, 0.0
  %v935 = vmul.f32 %v612, %v820
  %v936 = vmul.f32 %v617, %v820
  %v937 = vmul.f32 %v622, %v820
  %v938 = vmul.f32 %v627, %v820
  %v939 = vmul.f32 %v632, %v820
  %v940 = vmul.f32 %v637, %v820
  %v941 = vmul.f32 %v642, %v820
  %v942 = vmul.f32 %v647, %v820
  %v943 = vmul.f32 %v652, %v820
  %v944 = vmul.f32 %v657, %v820
  %v945 = vmul.f32 %v662, %v820
  %v946 = vmul.f32 %v667, %v820
  %v947 = vmul.f32 %v672, %v820
  %v948 = vmul.f32 %v677, %v820
  %v949 = vmul.f32 %v682, %v820
  %v950 = vmul.f32 %v687, %v820
  %v951 = vadd.f32 %v935, %v844
  %v952 = vadd.f32 %v936, %v844
  %v953 = vadd.f32 %v937, %v844
  %v954 = vadd.f32 %v938, %v844
  %v955 = vadd.f32 %v939, %v844
  %v956 = vadd.f32 %v940, %v844
  %v957 = vadd.f32 %v941, %v844
  %v958 = vadd.f32 %v942, %v844
  %v959 = vadd.f32 %v943, %v844
  %v960 = vadd.f32 %v944, %v844
  %v961 = vadd.f32 %v945, %v844
  %v962 = vadd.f32 %v946, %v844
  %v963 = vadd.f32 %v947, %v844
  %v964 = vadd.f32 %v948, %v844
  %v965 = vadd.f32 %v949, %v844
  %v966 = vadd.f32 %v950, %v844
  %v967 = vmax.f32 %v951, 0.0
  %v968 = vmax.f32 %v952, 0.0
  %v969 = vmax.f32 %v953, 0.0
  %v970 = vmax.f32 %v954, 0.0
  %v971 = vmax.f32 %v955, 0.0
  %v972 = vmax.f32 %v956, 0.0
  %v973 = vmax.f32 %v957, 0.0
  %v974 = vmax.f32 %v958, 0.0
  %v975 = vmax.f32 %v959, 0.0
  %v976 = vmax.f32 %v960, 0.0
  %v977 = vmax.f32 %v961, 0.0
  %v978 = vmax.f32 %v962, 0.0
  %v979 = vmax.f32 %v963, 0.0
  %v980 = vmax.f32 %v964, 0.0
  %v981 = vmax.f32 %v965, 0.0
  %v982 = vmax.f32 %v966, 0.0
  %983 = vrot.lane.b32.xlu0 %v820, 32
  %v984 = vpop.permute.xlu0 %983
  %v986 = vmul.f32 %v612, %v984
  %v987 = vmul.f32 %v617, %v984
  %v988 = vmul.f32 %v622, %v984
  %v989 = vmul.f32 %v627, %v984
  %v990 = vmul.f32 %v632, %v984
  %v991 = vmul.f32 %v637, %v984
  %v992 = vmul.f32 %v642, %v984
  %v993 = vmul.f32 %v647, %v984
  %v994 = vmul.f32 %v652, %v984
  %v995 = vmul.f32 %v657, %v984
  %v996 = vmul.f32 %v662, %v984
  %v997 = vmul.f32 %v667, %v984
  %v998 = vmul.f32 %v672, %v984
  %v999 = vmul.f32 %v677, %v984
  %v1000 = vmul.f32 %v682, %v984
  %v1001 = vmul.f32 %v687, %v984
  %1002 = vrot.lane.b32.xlu0 %v844, 32
  %v1003 = vpop.permute.xlu0 %1002
  %v1005 = vadd.f32 %v986, %v1003
  %v1006 = vadd.f32 %v987, %v1003
  %v1007 = vadd.f32 %v988, %v1003
  %v1008 = vadd.f32 %v989, %v1003
  %v1009 = vadd.f32 %v990, %v1003
  %v1010 = vadd.f32 %v991, %v1003
  %v1011 = vadd.f32 %v992, %v1003
  %v1012 = vadd.f32 %v993, %v1003
  %v1013 = vadd.f32 %v994, %v1003
  %v1014 = vadd.f32 %v995, %v1003
  %v1015 = vadd.f32 %v996, %v1003
  %v1016 = vadd.f32 %v997, %v1003
  %v1017 = vadd.f32 %v998, %v1003
  %v1018 = vadd.f32 %v999, %v1003
  %v1019 = vadd.f32 %v1000, %v1003
  %v1020 = vadd.f32 %v1001, %v1003
  %v1021 = vmax.f32 %v1005, 0.0
  %v1022 = vmax.f32 %v1006, 0.0
  %v1023 = vmax.f32 %v1007, 0.0
  %v1024 = vmax.f32 %v1008, 0.0
  %v1025 = vmax.f32 %v1009, 0.0
  %v1026 = vmax.f32 %v1010, 0.0
  %v1027 = vmax.f32 %v1011, 0.0
  %v1028 = vmax.f32 %v1012, 0.0
  %v1029 = vmax.f32 %v1013, 0.0
  %v1030 = vmax.f32 %v1014, 0.0
  %v1031 = vmax.f32 %v1015, 0.0
  %v1032 = vmax.f32 %v1016, 0.0
  %v1033 = vmax.f32 %v1017, 0.0
  %v1034 = vmax.f32 %v1018, 0.0
  %v1035 = vmax.f32 %v1019, 0.0
  %v1036 = vmax.f32 %v1020, 0.0
  %1053 = vrot.lane.b32.xlu0 %v919, 96
  %v1054 = vpop.permute.xlu0 %1053
  %1055 = vrot.lane.b32.xlu0 %v920, 96
  %v1056 = vpop.permute.xlu0 %1055
  %1057 = vrot.lane.b32.xlu0 %v921, 96
  %v1058 = vpop.permute.xlu0 %1057
  %1059 = vrot.lane.b32.xlu0 %v922, 96
  %v1060 = vpop.permute.xlu0 %1059
  %1061 = vrot.lane.b32.xlu0 %v923, 96
  %v1062 = vpop.permute.xlu0 %1061
  %1063 = vrot.lane.b32.xlu0 %v924, 96
  %v1064 = vpop.permute.xlu0 %1063
  %1065 = vrot.lane.b32.xlu0 %v925, 96
  %v1066 = vpop.permute.xlu0 %1065
  %1067 = vrot.lane.b32.xlu0 %v926, 96
  %v1068 = vpop.permute.xlu0 %1067
  %1069 = vrot.lane.b32.xlu0 %v927, 96
  %v1070 = vpop.permute.xlu0 %1069
  %1071 = vrot.lane.b32.xlu0 %v928, 96
  %v1072 = vpop.permute.xlu0 %1071
  %1073 = vrot.lane.b32.xlu0 %v929, 96
  %v1074 = vpop.permute.xlu0 %1073
  %1075 = vrot.lane.b32.xlu0 %v930, 96
  %v1076 = vpop.permute.xlu0 %1075
  %1077 = vrot.lane.b32.xlu0 %v931, 96
  %v1078 = vpop.permute.xlu0 %1077
  %1079 = vrot.lane.b32.xlu0 %v932, 96
  %v1080 = vpop.permute.xlu0 %1079
  %1081 = vrot.lane.b32.xlu0 %v933, 96
  %v1082 = vpop.permute.xlu0 %1081
  %1083 = vrot.lane.b32.xlu0 %v934, 96
  %v1084 = vpop.permute.xlu0 %1083
  %1101 = vrot.lane.b32.xlu0 %v967, 64
  %v1102 = vpop.permute.xlu0 %1101
  %1103 = vrot.lane.b32.xlu0 %v968, 64
  %v1104 = vpop.permute.xlu0 %1103
  %1105 = vrot.lane.b32.xlu0 %v969, 64
  %v1106 = vpop.permute.xlu0 %1105
  %1107 = vrot.lane.b32.xlu0 %v970, 64
  %v1108 = vpop.permute.xlu0 %1107
  %1109 = vrot.lane.b32.xlu0 %v971, 64
  %v1110 = vpop.permute.xlu0 %1109
  %1111 = vrot.lane.b32.xlu0 %v972, 64
  %v1112 = vpop.permute.xlu0 %1111
  %1113 = vrot.lane.b32.xlu0 %v973, 64
  %v1114 = vpop.permute.xlu0 %1113
  %1115 = vrot.lane.b32.xlu0 %v974, 64
  %v1116 = vpop.permute.xlu0 %1115
  %1117 = vrot.lane.b32.xlu0 %v975, 64
  %v1118 = vpop.permute.xlu0 %1117
  %1119 = vrot.lane.b32.xlu0 %v976, 64
  %v1120 = vpop.permute.xlu0 %1119
  %1121 = vrot.lane.b32.xlu0 %v977, 64
  %v1122 = vpop.permute.xlu0 %1121
  %1123 = vrot.lane.b32.xlu0 %v978, 64
  %v1124 = vpop.permute.xlu0 %1123
  %1125 = vrot.lane.b32.xlu0 %v979, 64
  %v1126 = vpop.permute.xlu0 %1125
  %1127 = vrot.lane.b32.xlu0 %v980, 64
  %v1128 = vpop.permute.xlu0 %1127
  %1129 = vrot.lane.b32.xlu0 %v981, 64
  %v1130 = vpop.permute.xlu0 %1129
  %1131 = vrot.lane.b32.xlu0 %v982, 64
  %v1132 = vpop.permute.xlu0 %1131
  %1149 = vrot.lane.b32.xlu0 %v1021, 32
  %v1150 = vpop.permute.xlu0 %1149
  %1151 = vrot.lane.b32.xlu0 %v1022, 32
  %v1152 = vpop.permute.xlu0 %1151
  %1153 = vrot.lane.b32.xlu0 %v1023, 32
  %v1154 = vpop.permute.xlu0 %1153
  %1155 = vrot.lane.b32.xlu0 %v1024, 32
  %v1156 = vpop.permute.xlu0 %1155
  %1157 = vrot.lane.b32.xlu0 %v1025, 32
  %v1158 = vpop.permute.xlu0 %1157
  %1159 = vrot.lane.b32.xlu0 %v1026, 32
  %v1160 = vpop.permute.xlu0 %1159
  %1161 = vrot.lane.b32.xlu0 %v1027, 32
  %v1162 = vpop.permute.xlu0 %1161
  %1163 = vrot.lane.b32.xlu0 %v1028, 32
  %v1164 = vpop.permute.xlu0 %1163
  %1165 = vrot.lane.b32.xlu0 %v1029, 32
  %v1166 = vpop.permute.xlu0 %1165
  %1167 = vrot.lane.b32.xlu0 %v1030, 32
  %v1168 = vpop.permute.xlu0 %1167
  %1169 = vrot.lane.b32.xlu0 %v1031, 32
  %v1170 = vpop.permute.xlu0 %1169
  %1171 = vrot.lane.b32.xlu0 %v1032, 32
  %v1172 = vpop.permute.xlu0 %1171
  %1173 = vrot.lane.b32.xlu0 %v1033, 32
  %v1174 = vpop.permute.xlu0 %1173
  %1175 = vrot.lane.b32.xlu0 %v1034, 32
  %v1176 = vpop.permute.xlu0 %1175
  %1177 = vrot.lane.b32.xlu0 %v1035, 32
  %v1178 = vpop.permute.xlu0 %1177
  %1179 = vrot.lane.b32.xlu0 %v1036, 32
  %v1180 = vpop.permute.xlu0 %1179
  %v1181 = vld [vmem:[%s4] sm:$0x7]
  %vm1182 = vcmask 261120
  %v1184 = vsel %vm1182, %v1181, 0
  %v1187 = vsel %vm1182, %v865, 0
  %v1190 = vsel %vm1182, %v866, 0
  %v1193 = vsel %vm1182, %v867, 0
  %v1196 = vsel %vm1182, %v868, 0
  %v1199 = vsel %vm1182, %v869, 0
  %v1202 = vsel %vm1182, %v870, 0
  %v1205 = vsel %vm1182, %v871, 0
  %v1208 = vsel %vm1182, %v872, 0
  %v1211 = vsel %vm1182, %v873, 0
  %v1214 = vsel %vm1182, %v874, 0
  %v1217 = vsel %vm1182, %v875, 0
  %v1220 = vsel %vm1182, %v876, 0
  %v1223 = vsel %vm1182, %v877, 0
  %v1226 = vsel %vm1182, %v878, 0
  %v1229 = vsel %vm1182, %v879, 0
  %v1232 = vsel %vm1182, %v880, 0
  %v1234 = vsel %vm1182, %v1054, 0
  %v1236 = vsel %vm1182, %v1056, 0
  %v1238 = vsel %vm1182, %v1058, 0
  %v1240 = vsel %vm1182, %v1060, 0
  %v1242 = vsel %vm1182, %v1062, 0
  %v1244 = vsel %vm1182, %v1064, 0
  %v1246 = vsel %vm1182, %v1066, 0
  %v1248 = vsel %vm1182, %v1068, 0
  %v1250 = vsel %vm1182, %v1070, 0
  %v1252 = vsel %vm1182, %v1072, 0
  %v1254 = vsel %vm1182, %v1074, 0
  %v1256 = vsel %vm1182, %v1076, 0
  %v1258 = vsel %vm1182, %v1078, 0
  %v1260 = vsel %vm1182, %v1080, 0
  %v1262 = vsel %vm1182, %v1082, 0
  %v1264 = vsel %vm1182, %v1084, 0
  %v1266 = vsel %vm1182, %v1102, 0
  %v1268 = vsel %vm1182, %v1104, 0
  %v1270 = vsel %vm1182, %v1106, 0
  %v1272 = vsel %vm1182, %v1108, 0
  %v1274 = vsel %vm1182, %v1110, 0
  %v1276 = vsel %vm1182, %v1112, 0
  %v1278 = vsel %vm1182, %v1114, 0
  %v1280 = vsel %vm1182, %v1116, 0
  %v1282 = vsel %vm1182, %v1118, 0
  %v1284 = vsel %vm1182, %v1120, 0
  %v1286 = vsel %vm1182, %v1122, 0
  %v1288 = vsel %vm1182, %v1124, 0
  %v1290 = vsel %vm1182, %v1126, 0
  %v1292 = vsel %vm1182, %v1128, 0
  %v1294 = vsel %vm1182, %v1130, 0
  %v1296 = vsel %vm1182, %v1132, 0
  %v1298 = vsel %vm1182, %v1150, 0
  %v1300 = vsel %vm1182, %v1152, 0
  %v1302 = vsel %vm1182, %v1154, 0
  %v1304 = vsel %vm1182, %v1156, 0
  %v1306 = vsel %vm1182, %v1158, 0
  %v1308 = vsel %vm1182, %v1160, 0
  %v1310 = vsel %vm1182, %v1162, 0
  %v1312 = vsel %vm1182, %v1164, 0
  %v1314 = vsel %vm1182, %v1166, 0
  %v1316 = vsel %vm1182, %v1168, 0
  %v1318 = vsel %vm1182, %v1170, 0
  %v1320 = vsel %vm1182, %v1172, 0
  %v1322 = vsel %vm1182, %v1174, 0
  %v1324 = vsel %vm1182, %v1176, 0
  %v1326 = vsel %vm1182, %v1178, 0
  %v1328 = vsel %vm1182, %v1180, 0
  %1330 = vmatprep.subr.mxu0 0.0
  %1331 = vmatpush1.xpose.msra.mxu0 %v1232
  %1332 = vmatprep.subr.mxu0 0.0
  %1333 = vmatpush1.xpose.msra.mxu0 %v1229
  %1334 = vmatprep.subr.mxu0 0.0
  %1335 = vmatpush1.xpose.msra.mxu0 %v1226
  %1336 = vmatprep.subr.mxu0 0.0
  %1337 = vmatpush1.xpose.msra.mxu0 %v1223
  %1338 = vmatprep.subr.mxu0 0.0
  %1339 = vmatpush1.xpose.msra.mxu0 %v1220
  %1340 = vmatprep.subr.mxu0 0.0
  %1341 = vmatpush1.xpose.msra.mxu0 %v1217
  %1342 = vmatprep.subr.mxu0 0.0
  %1343 = vmatpush1.xpose.msra.mxu0 %v1214
  %1344 = vmatprep.subr.mxu0 0.0
  %1345 = vmatpush1.xpose.msra.mxu0 %v1211
  %1346 = vmatprep.subr.mxu0 0.0
  %1347 = vmatpush1.xpose.msra.mxu0 %v1208
  %1348 = vmatprep.subr.mxu0 0.0
  %1349 = vmatpush1.xpose.msra.mxu0 %v1205
  %1350 = vmatprep.subr.mxu0 0.0
  %1351 = vmatpush1.xpose.msra.mxu0 %v1202
  %1352 = vmatprep.subr.mxu0 0.0
  %1353 = vmatpush1.xpose.msra.mxu0 %v1199
  %1354 = vmatprep.subr.mxu0 0.0
  %1355 = vmatpush1.xpose.msra.mxu0 %v1196
  %1356 = vmatprep.subr.mxu0 0.0
  %1357 = vmatpush1.xpose.msra.mxu0 %v1193
  %1358 = vmatprep.subr.mxu0 0.0
  %1359 = vmatpush1.xpose.msra.mxu0 %v1190
  %1360 = vmatprep.subr.mxu0 0.0
  %1361 = vmatpush1.xpose.msra.mxu0 %v1187
  %1362 = vmatprep.subr.mxu0 0.0
  %1363 = vmatpush2.xpose.msra.mxu0 %v1264
  %1364 = vmatprep.subr.mxu0 0.0
  %1365 = vmatpush2.xpose.msra.mxu0 %v1262
  %1366 = vmatprep.subr.mxu0 0.0
  %1367 = vmatpush2.xpose.msra.mxu0 %v1260
  %1368 = vmatprep.subr.mxu0 0.0
  %1369 = vmatpush2.xpose.msra.mxu0 %v1258
  %1370 = vmatprep.subr.mxu0 0.0
  %1371 = vmatpush2.xpose.msra.mxu0 %v1256
  %1372 = vmatprep.subr.mxu0 0.0
  %1373 = vmatpush2.xpose.msra.mxu0 %v1254
  %1374 = vmatprep.subr.mxu0 0.0
  %1375 = vmatpush2.xpose.msra.mxu0 %v1252
  %1376 = vmatprep.subr.mxu0 0.0
  %1377 = vmatpush2.xpose.msra.mxu0 %v1250
  %1378 = vmatprep.subr.mxu0 0.0
  %1379 = vmatpush2.xpose.msra.mxu0 %v1248
  %1380 = vmatprep.subr.mxu0 0.0
  %1381 = vmatpush2.xpose.msra.mxu0 %v1246
  %1382 = vmatprep.subr.mxu0 0.0
  %1383 = vmatpush2.xpose.msra.mxu0 %v1244
  %1384 = vmatprep.subr.mxu0 0.0
  %1385 = vmatpush2.xpose.msra.mxu0 %v1242
  %1386 = vmatprep.subr.mxu0 0.0
  %1387 = vmatpush2.xpose.msra.mxu0 %v1240
  %1388 = vmatprep.subr.mxu0 0.0
  %1389 = vmatpush2.xpose.msra.mxu0 %v1238
  %1390 = vmatprep.subr.mxu0 0.0
  %1391 = vmatpush2.xpose.msra.mxu0 %v1236
  %1392 = vmatprep.subr.mxu0 0.0
  %1393 = vmatpush2.xpose.msra.mxu0 %v1234
  %1394 = vmatprep.mubr.f32.mxu0 0.0
  %1395 = vmatmul.mubr.f32.gmra.mxu0 %v1184
  %v1396 = vpop.f32.mrf.mxu0
  %v1397 = vadd.f32 0.0, %v1396
  %v1398 = vpop.f32.mrf.mxu0
  %v1399 = vadd.f32 0.0, %v1398
  %1400 = vdwg.mxu0
  %1401 = vmatprep.subr.mxu0 0.0
  %1402 = vmatpush1.xpose.msra.mxu0 %v1296
  %1403 = vmatprep.subr.mxu0 0.0
  %1404 = vmatpush1.xpose.msra.mxu0 %v1294
  %1405 = vmatprep.subr.mxu0 0.0
  %1406 = vmatpush1.xpose.msra.mxu0 %v1292
  %1407 = vmatprep.subr.mxu0 0.0
  %1408 = vmatpush1.xpose.msra.mxu0 %v1290
  %1409 = vmatprep.subr.mxu0 0.0
  %1410 = vmatpush1.xpose.msra.mxu0 %v1288
  %1411 = vmatprep.subr.mxu0 0.0
  %1412 = vmatpush1.xpose.msra.mxu0 %v1286
  %1413 = vmatprep.subr.mxu0 0.0
  %1414 = vmatpush1.xpose.msra.mxu0 %v1284
  %1415 = vmatprep.subr.mxu0 0.0
  %1416 = vmatpush1.xpose.msra.mxu0 %v1282
  %1417 = vmatprep.subr.mxu0 0.0
  %1418 = vmatpush1.xpose.msra.mxu0 %v1280
  %1419 = vmatprep.subr.mxu0 0.0
  %1420 = vmatpush1.xpose.msra.mxu0 %v1278
  %1421 = vmatprep.subr.mxu0 0.0
  %1422 = vmatpush1.xpose.msra.mxu0 %v1276
  %1423 = vmatprep.subr.mxu0 0.0
  %1424 = vmatpush1.xpose.msra.mxu0 %v1274
  %1425 = vmatprep.subr.mxu0 0.0
  %1426 = vmatpush1.xpose.msra.mxu0 %v1272
  %1427 = vmatprep.subr.mxu0 0.0
  %1428 = vmatpush1.xpose.msra.mxu0 %v1270
  %1429 = vmatprep.subr.mxu0 0.0
  %1430 = vmatpush1.xpose.msra.mxu0 %v1268
  %1431 = vmatprep.subr.mxu0 0.0
  %1432 = vmatpush1.xpose.msra.mxu0 %v1266
  %1433 = vmatprep.subr.mxu0 0.0
  %1434 = vmatpush2.xpose.msra.mxu0 %v1328
  %1435 = vmatprep.subr.mxu0 0.0
  %1436 = vmatpush2.xpose.msra.mxu0 %v1326
  %1437 = vmatprep.subr.mxu0 0.0
  %1438 = vmatpush2.xpose.msra.mxu0 %v1324
  %1439 = vmatprep.subr.mxu0 0.0
  %1440 = vmatpush2.xpose.msra.mxu0 %v1322
  %1441 = vmatprep.subr.mxu0 0.0
  %1442 = vmatpush2.xpose.msra.mxu0 %v1320
  %1443 = vmatprep.subr.mxu0 0.0
  %1444 = vmatpush2.xpose.msra.mxu0 %v1318
  %1445 = vmatprep.subr.mxu0 0.0
  %1446 = vmatpush2.xpose.msra.mxu0 %v1316
  %1447 = vmatprep.subr.mxu0 0.0
  %1448 = vmatpush2.xpose.msra.mxu0 %v1314
  %1449 = vmatprep.subr.mxu0 0.0
  %1450 = vmatpush2.xpose.msra.mxu0 %v1312
  %1451 = vmatprep.subr.mxu0 0.0
  %1452 = vmatpush2.xpose.msra.mxu0 %v1310
  %1453 = vmatprep.subr.mxu0 0.0
  %1454 = vmatpush2.xpose.msra.mxu0 %v1308
  %1455 = vmatprep.subr.mxu0 0.0
  %1456 = vmatpush2.xpose.msra.mxu0 %v1306
  %1457 = vmatprep.subr.mxu0 0.0
  %1458 = vmatpush2.xpose.msra.mxu0 %v1304
  %1459 = vmatprep.subr.mxu0 0.0
  %1460 = vmatpush2.xpose.msra.mxu0 %v1302
  %1461 = vmatprep.subr.mxu0 0.0
  %1462 = vmatpush2.xpose.msra.mxu0 %v1300
  %1463 = vmatprep.subr.mxu0 0.0
  %1464 = vmatpush2.xpose.msra.mxu0 %v1298
  %1465 = vmatprep.mubr.f32.mxu0 0.0
  %1466 = vmatmul.mubr.f32.gmra.mxu0 %v1184
  %v1467 = vpop.f32.mrf.mxu0
  %v1468 = vadd.f32 0.0, %v1467
  %v1469 = vpop.f32.mrf.mxu0
  %v1470 = vadd.f32 0.0, %v1469
  %1471 = vdwg.mxu0
  %vm1472 = vcmask 1042432
  %v1473 = vsel %vm1472, %v1397, 0.0
  %v1474 = vsel %vm1472, %v1399, 0.0
  %v1475 = vadd.f32 %v1473, %v1474
  %v1476 = vsel %vm1472, %v1468, 0.0
  %v1477 = vadd.f32 %v1475, %v1476
  %v1478 = vsel %vm1472, %v1470, 0.0
  %v1479 = vadd.f32 %v1477, %v1478
  %1480 = vadd.xlane.f32.xlu0 %v1479
  %v1481 = vpop.xlane.xlu0 %1480
  %v1482 = vmul.f32 %v1481, %v776
  %v1483 = vmul.f32 %v1397, %v1397
  %v1484 = vmul.f32 %v1399, %v1399
  %v1485 = vmul.f32 %v1468, %v1468
  %v1486 = vmul.f32 %v1470, %v1470
  %v1487 = vsel %vm1472, %v1483, 0.0
  %v1488 = vsel %vm1472, %v1484, 0.0
  %v1489 = vadd.f32 %v1487, %v1488
  %v1490 = vsel %vm1472, %v1485, 0.0
  %v1491 = vadd.f32 %v1489, %v1490
  %v1492 = vsel %vm1472, %v1486, 0.0
  %v1493 = vadd.f32 %v1491, %v1492
  %1494 = vadd.xlane.f32.xlu0 %v1493
  %v1495 = vpop.xlane.xlu0 %1494
  %v1496 = vmul.f32 %v1495, %v776
  %v1497 = vmul.f32 %v1482, %v1482
  %v1498 = vsub.f32 %v1496, %v1497
  %v1499 = vmax.f32 %v1498, 0.0
  %v1500 = vld [vmem:[%s6] sm:$0x7]
  %v1501 = vadd.f32 %v1499, 1e-05
  %v1502 = vrsqrt.pop %v1501
  %v1503 = vmul.f32 %v1500, %v1502
  %v1504 = vmul.f32 %v1482, %v1503
  %1506 = vrot.lane.b32.xlu0 %v1504, 1
  %v1507 = vpop.permute.xlu0 %1506
  %v1509 = vsub.f32 %v1500, %v1507
  %1511 = vset.pattern.permute.xlu0 0
  %1512 = vperm.xlu0 %1511, %v1503
  %v1513 = vpop.permute.xlu0 %1512
  %v1515 = vmul.f32 %v1397, %v1513
  %v1516 = vmul.f32 %v1399, %v1513
  %v1517 = vmul.f32 %v1468, %v1513
  %v1518 = vmul.f32 %v1470, %v1513
  %1520 = vset.pattern.permute.xlu0 1
  %1521 = vperm.xlu0 %1520, %v1509
  %v1522 = vpop.permute.xlu0 %1521
  %v1524 = vadd.f32 %v1515, %v1522
  %v1525 = vadd.f32 %v1516, %v1522
  %v1526 = vadd.f32 %v1517, %v1522
  %v1527 = vadd.f32 %v1518, %v1522
  %v1528 = vxor.u32 %v1524, 2147483648
  %v1529 = vxor.u32 %v1525, 2147483648
  %v1530 = vxor.u32 %v1526, 2147483648
  %v1531 = vxor.u32 %v1527, 2147483648
  %v1532 = vmul.f32 %v1528, 1.442695
  %v1533 = vpow.pop %v1532
  %v1534 = vmul.f32 %v1529, 1.442695
  %v1535 = vpow.pop %v1534
  %v1536 = vmul.f32 %v1530, 1.442695
  %v1537 = vpow.pop %v1536
  %v1538 = vmul.f32 %v1531, 1.442695
  %v1539 = vpow.pop %v1538
  %v1540 = vadd.f32 %v1533, 1.0
  %v1541 = vadd.f32 %v1535, 1.0
  %v1542 = vadd.f32 %v1537, 1.0
  %v1543 = vadd.f32 %v1539, 1.0
  %v1544 = vrcp.pop %v1540
  %v1545 = vmul.f32 1.0, %v1544
  %v1546 = vrcp.pop %v1541
  %v1547 = vmul.f32 1.0, %v1546
  %v1548 = vrcp.pop %v1542
  %v1549 = vmul.f32 1.0, %v1548
  %v1550 = vrcp.pop %v1543
  %v1551 = vmul.f32 1.0, %v1550
  %v1556 = vcombine.low %v1545, %v1547
  %v1557 = vcombine.low %v1549, %v1551
  %1560 = vst [vmem:[%s7] sm:$0x77] %v1556
  %1561 = vst [vmem:[%s7 + $0x8] sm:$0x77] %v1557
  // Predicated region
  $region30: #{decoder_forward.1} parent=0 // pred_check
    _
  $region31: #{decoder_forward.1} parent=0 // pred_check_branch
    %1563 = sbr.rel (0) target = $region33
  $region32: #{decoder_forward.1} parent=0 // pred_region
    _
  $region33: #{decoder_forward.1} parent=0 // pred_fallthru
    _
  // Predicated region
  $region34: #{decoder_forward.1} parent=0 // pred_check
    _
  $region35: #{decoder_forward.1} parent=0 // pred_check_branch
    %1565 = sbr.rel (0) target = $region37
  $region36: #{decoder_forward.1} parent=0 // pred_region
    _
  $region37: #{decoder_forward.1} parent=0 // pred_fallthru
    _

</llo_original>
